<compile_context>
chip_gen: v7x
topology: tpu7x:2x2x1
jax: 0.10.0
libtpu: 0.0.40
codegen_flags: <defaults>
</compile_context>

<pallas_src>
import functools

import jax
import jax.numpy as jnp
from jax.experimental import pallas as pl
from jax.experimental.pallas import tpu as pltpu


# ----------------------------- fused Pallas kernel --------------------------


def _p_z2_e2_fused_kernel(
    wb_ref,            # SMEM (2, 1)  weight_b
    e2c_ref, e2d_ref,  # VMEM (N, D)
    comm_w_ref, diff_w_ref,          # VMEM (P, D)  Adj_Generator weights
    gc1_w_ref, gc1_b_ref,            # VMEM (2D, G), (1, G)
    gc2_w_ref, gc2_b_ref,            # VMEM (G, G), (1, G)
    mlp1_w_ref, mlp1_b_ref,          # VMEM (G, H), (1, H)
    mlp2_w_ref, mlp2_b_ref,          # VMEM (H, 2*Z), (1, 2*Z)
    mu_ref, logvar_ref,              # VMEM (N, Z) outputs
    *, z2_dim):
    f32 = jnp.float32

    def adj_from(ctx, w):
        """Adj_Generator.forward: row-normalized masked mean cosine similarity."""
        p_count, d = w.shape
        # squared L2 norm of (ctx[n] * w[p]) over d, for every (n, p):
        #   sumsq[n, p] = sum_d ctx[n, d]^2 * w[p, d]^2   -> one small matmul
        sumsq = jax.lax.dot_general(
            ctx * ctx, w * w, (((1,), (1,)), ((), ())),
            preferred_element_type=f32)                      # (N, P)
        # F.normalize: x / max(||x||, 1e-12)  ==  x * rsqrt(max(||x||^2, 1e-24))
        inv = jax.lax.rsqrt(jnp.maximum(sumsq, 1e-24))       # (N, P), EUP rsqrt
        # Lane-dense X[n, p*D + d] = ctx[n, d] * w[p, d] * inv[n, p]
        # (built with 2-D slices/broadcasts + lane concat; no 3-D reshape).
        pieces = [ctx * w[p:p + 1, :] * inv[:, p:p + 1] for p in range(p_count)]
        x = jnp.concatenate(pieces, axis=1)                  # (N, P*D)
        # mean_p (cn_p @ cn_p^T)  ==  (X @ X^T) / P   -> single MXU contraction
        att = jax.lax.dot_general(
            x, x, (((1,), (1,)), ((), ())),
            preferred_element_type=f32) * (1.0 / p_count)    # (N, N)
        # mask non-positive entries, then row-normalize (clamped at 1e-12)
        att = jnp.where(att > 0.0, att, 0.0)
        denom = jnp.maximum(jnp.sum(att, axis=-1, keepdims=True), 1e-12)
        return att / denom

    e2c = e2c_ref[...].astype(f32)
    e2d = e2d_ref[...].astype(f32)

    # --- adjacency generation (adj_gen == 'seperate') + weighted combination ---
    comm_adj = adj_from(e2c, comm_w_ref[...].astype(f32))
    diff_adj = adj_from(e2d, diff_w_ref[...].astype(f32))
    wb0 = wb_ref[0, 0]
    wb1 = wb_ref[1, 0]
    final_a = wb0 * comm_adj + wb1 * diff_adj                # (N, N)

    # --- features (feat_type == 'e2') ---
    x_feat = jnp.concatenate([e2c, e2d], axis=1)             # (N, 2*D)

    # --- 2-layer GCN: out = adj @ (x @ W) + b ; dropout = identity ---
    s1 = jnp.dot(x_feat, gc1_w_ref[...], preferred_element_type=f32)
    u1 = jnp.maximum(
        jnp.dot(final_a, s1, preferred_element_type=f32) + gc1_b_ref[...], 0.0)
    s2 = jnp.dot(u1, gc2_w_ref[...], preferred_element_type=f32)
    u2 = jnp.dot(final_a, s2, preferred_element_type=f32) + gc2_b_ref[...]
    final_u = (u1 + u2) * 0.5

    # --- MLP head (dis_agg == 'concat'); dropout = identity ---
    h = jnp.maximum(
        jnp.dot(final_u, mlp1_w_ref[...], preferred_element_type=f32)
        + mlp1_b_ref[...], 0.0)
    h = jnp.dot(h, mlp2_w_ref[...], preferred_element_type=f32) + mlp2_b_ref[...]

    mu_ref[...] = h[:, :z2_dim]
    logvar_ref[...] = h[:, z2_dim:]


# ----------------------------- wrapper ---------------------------------------

_VMEM = pl.BlockSpec(memory_space=pltpu.MemorySpace.VMEM)
_SMEM = pl.BlockSpec(memory_space=pltpu.MemorySpace.SMEM)


def p_z2_e2_forward(params, e2_c, e2_d, feats, z2_dim):
    """Fused forward pass. `feats` is unused because z2_feat_type == 'e2'."""
    del feats  # feat_type == 'e2' -> features come from concat(e2_c, e2_d)
    n = e2_c.shape[0]

    inputs = (
        params["weight_b"],                       # SMEM scalars
        e2_c, e2_d,
        params["comm_adj_w"], params["diff_adj_w"],
        params["gc1_w"], params["gc1_b"],
        params["gc2_w"], params["gc2_b"],
        params["mlp1_w"], params["mlp1_b"],
        params["mlp2_w"], params["mlp2_b"],
    )
    in_specs = [_SMEM] + [_VMEM] * (len(inputs) - 1)

    kernel = functools.partial(_p_z2_e2_fused_kernel, z2_dim=z2_dim)
    z2_mu, z2_logvar = pl.pallas_call(
        kernel,
        out_shape=(jax.ShapeDtypeStruct((n, z2_dim), jnp.float32),
                   jax.ShapeDtypeStruct((n, z2_dim), jnp.float32)),
        in_specs=in_specs,
        out_specs=(_VMEM, _VMEM),
    )(*inputs)
    return [z2_mu, z2_logvar]


# ----------------------------- parameter init --------------------------------


def xavier_uniform(key, shape):
    fan_in, fan_out = shape[0], shape[1]
    bound = jnp.sqrt(6.0 / (fan_in + fan_out))
    return jax.random.uniform(key, shape, jnp.float32, -bound, bound)


def linear_init(key, d_in, d_out):
    kw, kb = jax.random.split(key)
    bound = 1.0 / jnp.sqrt(jnp.float32(d_in))
    # stored transposed vs. torch.nn.Linear: W is [d_in, d_out]
    w = jax.random.uniform(kw, (d_in, d_out), jnp.float32, -bound, bound)
    b = jax.random.uniform(kb, (1, d_out), jnp.float32, -bound, bound)
    return w, b


def init_params(key, e2_dim, gn_dim, mlp_hidden, z2_dim, n_per=16):
    ks = jax.random.split(key, 8)
    params = {}
    # Adj_Generator weights ('seperate': one for e2_c, one for e2_d)
    params["comm_adj_w"] = xavier_uniform(ks[0], (n_per, e2_dim))
    params["diff_adj_w"] = xavier_uniform(ks[1], (n_per, e2_dim))
    # weight_b: torch.nn.init.uniform_(a=0, b=1), shape (2, 1)
    params["weight_b"] = jax.random.uniform(ks[2], (2, 1), jnp.float32, 0.0, 1.0)
    # GCN layers (feat_type == 'e2' -> in_dim = 2 * e2_dim)
    in_dim = 2 * e2_dim
    params["gc1_w"] = xavier_uniform(ks[3], (in_dim, gn_dim))
    params["gc1_b"] = jnp.zeros((1, gn_dim), jnp.float32)
    params["gc2_w"] = xavier_uniform(ks[4], (gn_dim, gn_dim))
    params["gc2_b"] = jnp.zeros((1, gn_dim), jnp.float32)
    # MLP (dis_agg == 'concat'): gn_dim -> mlp_hidden -> 2 * z2_dim
    params["mlp1_w"], params["mlp1_b"] = linear_init(ks[5], gn_dim, mlp_hidden)
    params["mlp2_w"], params["mlp2_b"] = linear_init(ks[6], mlp_hidden,
                                                     2 * z2_dim)
    return params


# ----------------------------- pure-JAX reference -----------------------------


def p_z2_e2_reference(params, e2_c, e2_d, feats, z2_dim):
    del feats

    def adj_gen(ctx, w):
        fc = ctx[None, :, :] * w[:, None, :]                     # (P, N, D)
        nrm = jnp.sqrt(jnp.sum(fc * fc, axis=-1, keepdims=True))
        cn = fc / jnp.maximum(nrm, 1e-12)
        att = jnp.einsum("pnd,pmd->pnm", cn, cn).mean(0)
        att = jnp.where(att > 0.0, att, 0.0)
        return att / jnp.maximum(att.sum(-1, keepdims=True), 1e-12)

    comm = adj_gen(e2_c, params["comm_adj_w"])
    diff = adj_gen(e2_d, params["diff_adj_w"])
    wb = params["weight_b"]
    a = wb[0, 0] * comm + wb[1, 0] * diff
    x = jnp.concatenate([e2_c, e2_d], axis=1)
    u1 = jax.nn.relu(a @ (x @ params["gc1_w"]) + params["gc1_b"])
    u2 = a @ (u1 @ params["gc2_w"]) + params["gc2_b"]
    fu = (u1 + u2) * 0.5
    h = jax.nn.relu(fu @ params["mlp1_w"] + params["mlp1_b"])
    h = h @ params["mlp2_w"] + params["mlp2_b"]
    return h[:, :z2_dim], h[:, z2_dim:]


# ----------------------------- main -------------------------------------------

if __name__ == "__main__":
    N = 8          # number of graph nodes
    E2_DIM = 16    # args.e2_dim
    N_FEAT = 16    # raw node feature dim (unused: feat_type == 'e2')
    GN_DIM = 32    # args.z2_gn_dim
    MLP_HIDDEN = 32
    Z2_DIM = 8     # args.z2_dim

    key = jax.random.PRNGKey(0)
    k_p, k_c, k_d, k_f = jax.random.split(key, 4)

    params = init_params(k_p, E2_DIM, GN_DIM, MLP_HIDDEN, Z2_DIM)

    e2_c = jax.random.normal(k_c, (N, E2_DIM), jnp.float32)
    e2_d = jax.random.normal(k_d, (N, E2_DIM), jnp.float32)
    feats = jax.random.normal(k_f, (N, N_FEAT), jnp.float32)

    z2_mu, z2_logvar = p_z2_e2_forward(params, e2_c, e2_d, feats, Z2_DIM)
    jax.block_until_ready(z2_mu)
    jax.block_until_ready(z2_logvar)

    assert z2_mu.shape == (N, Z2_DIM)
    assert z2_logvar.shape == (N, Z2_DIM)
    assert jnp.all(jnp.isfinite(z2_mu)) and jnp.all(jnp.isfinite(z2_logvar))

    ref_mu, ref_logvar = p_z2_e2_reference(params, e2_c, e2_d, feats, Z2_DIM)
    assert jnp.allclose(z2_mu, ref_mu, rtol=1e-2, atol=1e-3)
    assert jnp.allclose(z2_logvar, ref_logvar, rtol=1e-2, atol=1e-3)

    print("KERNEL_OK")
</pallas_src>

<mosaic_0001>
module attributes {stable_mosaic.version = 11 : i64} {
  func.func @_p_z2_e2_fused_kernel(%arg0: memref<2x1xf32, #tpu.memory_space<smem>>, %arg1: memref<8x16xf32, #tpu.memory_space<vmem>>, %arg2: memref<8x16xf32, #tpu.memory_space<vmem>>, %arg3: memref<16x16xf32, #tpu.memory_space<vmem>>, %arg4: memref<16x16xf32, #tpu.memory_space<vmem>>, %arg5: memref<32x32xf32, #tpu.memory_space<vmem>>, %arg6: memref<1x32xf32, #tpu.memory_space<vmem>>, %arg7: memref<32x32xf32, #tpu.memory_space<vmem>>, %arg8: memref<1x32xf32, #tpu.memory_space<vmem>>, %arg9: memref<32x32xf32, #tpu.memory_space<vmem>>, %arg10: memref<1x32xf32, #tpu.memory_space<vmem>>, %arg11: memref<32x16xf32, #tpu.memory_space<vmem>>, %arg12: memref<1x16xf32, #tpu.memory_space<vmem>>, %arg13: memref<8x8xf32, #tpu.memory_space<vmem>>, %arg14: memref<8x8xf32, #tpu.memory_space<vmem>>) attributes {dimension_semantics = [], scalar_prefetch = 0 : i64, scratch_operands = 0 : i64, tpu.core_type = #tpu.core_type<tc>} {
    %c0 = arith.constant 0 : index
    %c0_0 = arith.constant 0 : index
    %0 = vector.load %arg1[%c0, %c0_0] : memref<8x16xf32, #tpu.memory_space<vmem>>, vector<8x16xf32>
    %c0_1 = arith.constant 0 : index
    %c0_2 = arith.constant 0 : index
    %1 = vector.load %arg2[%c0_1, %c0_2] : memref<8x16xf32, #tpu.memory_space<vmem>>, vector<8x16xf32>
    %c0_3 = arith.constant 0 : index
    %c0_4 = arith.constant 0 : index
    %2 = vector.load %arg3[%c0_3, %c0_4] : memref<16x16xf32, #tpu.memory_space<vmem>>, vector<16x16xf32>
    %3 = arith.mulf %0, %0 : vector<8x16xf32>
    %4 = arith.mulf %2, %2 : vector<16x16xf32>
    %cst = arith.constant dense<0.000000e+00> : vector<8x16xf32>
    %5 = tpu.matmul %3, %4, %cst {dimension_numbers = #tpu.dot_dimension_numbers<[1], [1], [0], [0], [0, 0, 1, 0], [], []>} : vector<8x16xf32>, vector<16x16xf32>, vector<8x16xf32> -> vector<8x16xf32>
    %cst_5 = arith.constant 1.000000e-24 : f32
    %6 = vector.broadcast %cst_5 : f32 to vector<8x16xf32>
    %7 = arith.maximumf %5, %6 : vector<8x16xf32>
    %8 = math.rsqrt %7 : vector<8x16xf32>
    %9 = vector.extract_strided_slice %2 {offsets = [0, 0], sizes = [1, 16], strides = [1, 1]} : vector<16x16xf32> to vector<1x16xf32>
    %10 = vector.broadcast %9 : vector<1x16xf32> to vector<8x16xf32>
    %11 = arith.mulf %0, %10 : vector<8x16xf32>
    %12 = vector.extract_strided_slice %8 {offsets = [0, 0], sizes = [8, 1], strides = [1, 1]} : vector<8x16xf32> to vector<8x1xf32>
    %13 = vector.broadcast %12 : vector<8x1xf32> to vector<8x16xf32>
    %14 = arith.mulf %11, %13 : vector<8x16xf32>
    %15 = vector.extract_strided_slice %2 {offsets = [1, 0], sizes = [1, 16], strides = [1, 1]} : vector<16x16xf32> to vector<1x16xf32>
    %16 = vector.broadcast %15 : vector<1x16xf32> to vector<8x16xf32>
    %17 = arith.mulf %0, %16 : vector<8x16xf32>
    %18 = vector.extract_strided_slice %8 {offsets = [0, 1], sizes = [8, 1], strides = [1, 1]} : vector<8x16xf32> to vector<8x1xf32>
    %19 = vector.broadcast %18 : vector<8x1xf32> to vector<8x16xf32>
    %20 = arith.mulf %17, %19 : vector<8x16xf32>
    %21 = vector.extract_strided_slice %2 {offsets = [2, 0], sizes = [1, 16], strides = [1, 1]} : vector<16x16xf32> to vector<1x16xf32>
    %22 = vector.broadcast %21 : vector<1x16xf32> to vector<8x16xf32>
    %23 = arith.mulf %0, %22 : vector<8x16xf32>
    %24 = vector.extract_strided_slice %8 {offsets = [0, 2], sizes = [8, 1], strides = [1, 1]} : vector<8x16xf32> to vector<8x1xf32>
    %25 = vector.broadcast %24 : vector<8x1xf32> to vector<8x16xf32>
    %26 = arith.mulf %23, %25 : vector<8x16xf32>
    %27 = vector.extract_strided_slice %2 {offsets = [3, 0], sizes = [1, 16], strides = [1, 1]} : vector<16x16xf32> to vector<1x16xf32>
    %28 = vector.broadcast %27 : vector<1x16xf32> to vector<8x16xf32>
    %29 = arith.mulf %0, %28 : vector<8x16xf32>
    %30 = vector.extract_strided_slice %8 {offsets = [0, 3], sizes = [8, 1], strides = [1, 1]} : vector<8x16xf32> to vector<8x1xf32>
    %31 = vector.broadcast %30 : vector<8x1xf32> to vector<8x16xf32>
    %32 = arith.mulf %29, %31 : vector<8x16xf32>
    %33 = vector.extract_strided_slice %2 {offsets = [4, 0], sizes = [1, 16], strides = [1, 1]} : vector<16x16xf32> to vector<1x16xf32>
    %34 = vector.broadcast %33 : vector<1x16xf32> to vector<8x16xf32>
    %35 = arith.mulf %0, %34 : vector<8x16xf32>
    %36 = vector.extract_strided_slice %8 {offsets = [0, 4], sizes = [8, 1], strides = [1, 1]} : vector<8x16xf32> to vector<8x1xf32>
    %37 = vector.broadcast %36 : vector<8x1xf32> to vector<8x16xf32>
    %38 = arith.mulf %35, %37 : vector<8x16xf32>
    %39 = vector.extract_strided_slice %2 {offsets = [5, 0], sizes = [1, 16], strides = [1, 1]} : vector<16x16xf32> to vector<1x16xf32>
    %40 = vector.broadcast %39 : vector<1x16xf32> to vector<8x16xf32>
    %41 = arith.mulf %0, %40 : vector<8x16xf32>
    %42 = vector.extract_strided_slice %8 {offsets = [0, 5], sizes = [8, 1], strides = [1, 1]} : vector<8x16xf32> to vector<8x1xf32>
    %43 = vector.broadcast %42 : vector<8x1xf32> to vector<8x16xf32>
    %44 = arith.mulf %41, %43 : vector<8x16xf32>
    %45 = vector.extract_strided_slice %2 {offsets = [6, 0], sizes = [1, 16], strides = [1, 1]} : vector<16x16xf32> to vector<1x16xf32>
    %46 = vector.broadcast %45 : vector<1x16xf32> to vector<8x16xf32>
    %47 = arith.mulf %0, %46 : vector<8x16xf32>
    %48 = vector.extract_strided_slice %8 {offsets = [0, 6], sizes = [8, 1], strides = [1, 1]} : vector<8x16xf32> to vector<8x1xf32>
    %49 = vector.broadcast %48 : vector<8x1xf32> to vector<8x16xf32>
    %50 = arith.mulf %47, %49 : vector<8x16xf32>
    %51 = vector.extract_strided_slice %2 {offsets = [7, 0], sizes = [1, 16], strides = [1, 1]} : vector<16x16xf32> to vector<1x16xf32>
    %52 = vector.broadcast %51 : vector<1x16xf32> to vector<8x16xf32>
    %53 = arith.mulf %0, %52 : vector<8x16xf32>
    %54 = vector.extract_strided_slice %8 {offsets = [0, 7], sizes = [8, 1], strides = [1, 1]} : vector<8x16xf32> to vector<8x1xf32>
    %55 = vector.broadcast %54 : vector<8x1xf32> to vector<8x16xf32>
    %56 = arith.mulf %53, %55 : vector<8x16xf32>
    %57 = vector.extract_strided_slice %2 {offsets = [8, 0], sizes = [1, 16], strides = [1, 1]} : vector<16x16xf32> to vector<1x16xf32>
    %58 = vector.broadcast %57 : vector<1x16xf32> to vector<8x16xf32>
    %59 = arith.mulf %0, %58 : vector<8x16xf32>
    %60 = vector.extract_strided_slice %8 {offsets = [0, 8], sizes = [8, 1], strides = [1, 1]} : vector<8x16xf32> to vector<8x1xf32>
    %61 = vector.broadcast %60 : vector<8x1xf32> to vector<8x16xf32>
    %62 = arith.mulf %59, %61 : vector<8x16xf32>
    %63 = vector.extract_strided_slice %2 {offsets = [9, 0], sizes = [1, 16], strides = [1, 1]} : vector<16x16xf32> to vector<1x16xf32>
    %64 = vector.broadcast %63 : vector<1x16xf32> to vector<8x16xf32>
    %65 = arith.mulf %0, %64 : vector<8x16xf32>
    %66 = vector.extract_strided_slice %8 {offsets = [0, 9], sizes = [8, 1], strides = [1, 1]} : vector<8x16xf32> to vector<8x1xf32>
    %67 = vector.broadcast %66 : vector<8x1xf32> to vector<8x16xf32>
    %68 = arith.mulf %65, %67 : vector<8x16xf32>
    %69 = vector.extract_strided_slice %2 {offsets = [10, 0], sizes = [1, 16], strides = [1, 1]} : vector<16x16xf32> to vector<1x16xf32>
    %70 = vector.broadcast %69 : vector<1x16xf32> to vector<8x16xf32>
    %71 = arith.mulf %0, %70 : vector<8x16xf32>
    %72 = vector.extract_strided_slice %8 {offsets = [0, 10], sizes = [8, 1], strides = [1, 1]} : vector<8x16xf32> to vector<8x1xf32>
    %73 = vector.broadcast %72 : vector<8x1xf32> to vector<8x16xf32>
    %74 = arith.mulf %71, %73 : vector<8x16xf32>
    %75 = vector.extract_strided_slice %2 {offsets = [11, 0], sizes = [1, 16], strides = [1, 1]} : vector<16x16xf32> to vector<1x16xf32>
    %76 = vector.broadcast %75 : vector<1x16xf32> to vector<8x16xf32>
    %77 = arith.mulf %0, %76 : vector<8x16xf32>
    %78 = vector.extract_strided_slice %8 {offsets = [0, 11], sizes = [8, 1], strides = [1, 1]} : vector<8x16xf32> to vector<8x1xf32>
    %79 = vector.broadcast %78 : vector<8x1xf32> to vector<8x16xf32>
    %80 = arith.mulf %77, %79 : vector<8x16xf32>
    %81 = vector.extract_strided_slice %2 {offsets = [12, 0], sizes = [1, 16], strides = [1, 1]} : vector<16x16xf32> to vector<1x16xf32>
    %82 = vector.broadcast %81 : vector<1x16xf32> to vector<8x16xf32>
    %83 = arith.mulf %0, %82 : vector<8x16xf32>
    %84 = vector.extract_strided_slice %8 {offsets = [0, 12], sizes = [8, 1], strides = [1, 1]} : vector<8x16xf32> to vector<8x1xf32>
    %85 = vector.broadcast %84 : vector<8x1xf32> to vector<8x16xf32>
    %86 = arith.mulf %83, %85 : vector<8x16xf32>
    %87 = vector.extract_strided_slice %2 {offsets = [13, 0], sizes = [1, 16], strides = [1, 1]} : vector<16x16xf32> to vector<1x16xf32>
    %88 = vector.broadcast %87 : vector<1x16xf32> to vector<8x16xf32>
    %89 = arith.mulf %0, %88 : vector<8x16xf32>
    %90 = vector.extract_strided_slice %8 {offsets = [0, 13], sizes = [8, 1], strides = [1, 1]} : vector<8x16xf32> to vector<8x1xf32>
    %91 = vector.broadcast %90 : vector<8x1xf32> to vector<8x16xf32>
    %92 = arith.mulf %89, %91 : vector<8x16xf32>
    %93 = vector.extract_strided_slice %2 {offsets = [14, 0], sizes = [1, 16], strides = [1, 1]} : vector<16x16xf32> to vector<1x16xf32>
    %94 = vector.broadcast %93 : vector<1x16xf32> to vector<8x16xf32>
    %95 = arith.mulf %0, %94 : vector<8x16xf32>
    %96 = vector.extract_strided_slice %8 {offsets = [0, 14], sizes = [8, 1], strides = [1, 1]} : vector<8x16xf32> to vector<8x1xf32>
    %97 = vector.broadcast %96 : vector<8x1xf32> to vector<8x16xf32>
    %98 = arith.mulf %95, %97 : vector<8x16xf32>
    %99 = vector.extract_strided_slice %2 {offsets = [15, 0], sizes = [1, 16], strides = [1, 1]} : vector<16x16xf32> to vector<1x16xf32>
    %100 = vector.broadcast %99 : vector<1x16xf32> to vector<8x16xf32>
    %101 = arith.mulf %0, %100 : vector<8x16xf32>
    %102 = vector.extract_strided_slice %8 {offsets = [0, 15], sizes = [8, 1], strides = [1, 1]} : vector<8x16xf32> to vector<8x1xf32>
    %103 = vector.broadcast %102 : vector<8x1xf32> to vector<8x16xf32>
    %104 = arith.mulf %101, %103 : vector<8x16xf32>
    %105 = tpu.concatenate %14, %20, %26, %32, %38, %44, %50, %56, %62, %68, %74, %80, %86, %92, %98, %104 in 1 : vector<8x16xf32>, vector<8x16xf32>, vector<8x16xf32>, vector<8x16xf32>, vector<8x16xf32>, vector<8x16xf32>, vector<8x16xf32>, vector<8x16xf32>, vector<8x16xf32>, vector<8x16xf32>, vector<8x16xf32>, vector<8x16xf32>, vector<8x16xf32>, vector<8x16xf32>, vector<8x16xf32>, vector<8x16xf32> -> vector<8x256xf32>
    %cst_6 = arith.constant dense<0.000000e+00> : vector<8x8xf32>
    %106 = tpu.matmul %105, %105, %cst_6 {dimension_numbers = #tpu.dot_dimension_numbers<[1], [1], [0], [0], [0, 0, 1, 0], [], []>} : vector<8x256xf32>, vector<8x256xf32>, vector<8x8xf32> -> vector<8x8xf32>
    %cst_7 = arith.constant 6.250000e-02 : f32
    %107 = vector.broadcast %cst_7 : f32 to vector<8x8xf32>
    %108 = arith.mulf %106, %107 : vector<8x8xf32>
    %cst_8 = arith.constant 0.000000e+00 : f32
    %109 = vector.broadcast %cst_8 : f32 to vector<8x8xf32>
    %110 = arith.cmpf ogt, %108, %109 : vector<8x8xf32>
    %cst_9 = arith.constant 0.000000e+00 : f32
    %111 = vector.broadcast %cst_9 : f32 to vector<8x8xf32>
    %112 = arith.select %110, %108, %111 : vector<8x8xi1>, vector<8x8xf32>
    %cst_10 = arith.constant dense<0.000000e+00> : vector<8xf32>
    %113 = vector.multi_reduction <add>, %112, %cst_10 [1] : vector<8x8xf32> to vector<8xf32>
    %114 = vector.shape_cast %113 : vector<8xf32> to vector<8x1xf32>
    %cst_11 = arith.constant 9.99999996E-13 : f32
    %115 = vector.broadcast %cst_11 : f32 to vector<8x1xf32>
    %116 = arith.maximumf %114, %115 : vector<8x1xf32>
    %117 = vector.broadcast %116 : vector<8x1xf32> to vector<8x8xf32>
    %118 = arith.divf %112, %117 : vector<8x8xf32>
    %c0_12 = arith.constant 0 : index
    %c0_13 = arith.constant 0 : index
    %119 = vector.load %arg4[%c0_12, %c0_13] : memref<16x16xf32, #tpu.memory_space<vmem>>, vector<16x16xf32>
    %120 = arith.mulf %1, %1 : vector<8x16xf32>
    %121 = arith.mulf %119, %119 : vector<16x16xf32>
    %cst_14 = arith.constant dense<0.000000e+00> : vector<8x16xf32>
    %122 = tpu.matmul %120, %121, %cst_14 {dimension_numbers = #tpu.dot_dimension_numbers<[1], [1], [0], [0], [0, 0, 1, 0], [], []>} : vector<8x16xf32>, vector<16x16xf32>, vector<8x16xf32> -> vector<8x16xf32>
    %cst_15 = arith.constant 1.000000e-24 : f32
    %123 = vector.broadcast %cst_15 : f32 to vector<8x16xf32>
    %124 = arith.maximumf %122, %123 : vector<8x16xf32>
    %125 = math.rsqrt %124 : vector<8x16xf32>
    %126 = vector.extract_strided_slice %119 {offsets = [0, 0], sizes = [1, 16], strides = [1, 1]} : vector<16x16xf32> to vector<1x16xf32>
    %127 = vector.broadcast %126 : vector<1x16xf32> to vector<8x16xf32>
    %128 = arith.mulf %1, %127 : vector<8x16xf32>
    %129 = vector.extract_strided_slice %125 {offsets = [0, 0], sizes = [8, 1], strides = [1, 1]} : vector<8x16xf32> to vector<8x1xf32>
    %130 = vector.broadcast %129 : vector<8x1xf32> to vector<8x16xf32>
    %131 = arith.mulf %128, %130 : vector<8x16xf32>
    %132 = vector.extract_strided_slice %119 {offsets = [1, 0], sizes = [1, 16], strides = [1, 1]} : vector<16x16xf32> to vector<1x16xf32>
    %133 = vector.broadcast %132 : vector<1x16xf32> to vector<8x16xf32>
    %134 = arith.mulf %1, %133 : vector<8x16xf32>
    %135 = vector.extract_strided_slice %125 {offsets = [0, 1], sizes = [8, 1], strides = [1, 1]} : vector<8x16xf32> to vector<8x1xf32>
    %136 = vector.broadcast %135 : vector<8x1xf32> to vector<8x16xf32>
    %137 = arith.mulf %134, %136 : vector<8x16xf32>
    %138 = vector.extract_strided_slice %119 {offsets = [2, 0], sizes = [1, 16], strides = [1, 1]} : vector<16x16xf32> to vector<1x16xf32>
    %139 = vector.broadcast %138 : vector<1x16xf32> to vector<8x16xf32>
    %140 = arith.mulf %1, %139 : vector<8x16xf32>
    %141 = vector.extract_strided_slice %125 {offsets = [0, 2], sizes = [8, 1], strides = [1, 1]} : vector<8x16xf32> to vector<8x1xf32>
    %142 = vector.broadcast %141 : vector<8x1xf32> to vector<8x16xf32>
    %143 = arith.mulf %140, %142 : vector<8x16xf32>
    %144 = vector.extract_strided_slice %119 {offsets = [3, 0], sizes = [1, 16], strides = [1, 1]} : vector<16x16xf32> to vector<1x16xf32>
    %145 = vector.broadcast %144 : vector<1x16xf32> to vector<8x16xf32>
    %146 = arith.mulf %1, %145 : vector<8x16xf32>
    %147 = vector.extract_strided_slice %125 {offsets = [0, 3], sizes = [8, 1], strides = [1, 1]} : vector<8x16xf32> to vector<8x1xf32>
    %148 = vector.broadcast %147 : vector<8x1xf32> to vector<8x16xf32>
    %149 = arith.mulf %146, %148 : vector<8x16xf32>
    %150 = vector.extract_strided_slice %119 {offsets = [4, 0], sizes = [1, 16], strides = [1, 1]} : vector<16x16xf32> to vector<1x16xf32>
    %151 = vector.broadcast %150 : vector<1x16xf32> to vector<8x16xf32>
    %152 = arith.mulf %1, %151 : vector<8x16xf32>
    %153 = vector.extract_strided_slice %125 {offsets = [0, 4], sizes = [8, 1], strides = [1, 1]} : vector<8x16xf32> to vector<8x1xf32>
    %154 = vector.broadcast %153 : vector<8x1xf32> to vector<8x16xf32>
    %155 = arith.mulf %152, %154 : vector<8x16xf32>
    %156 = vector.extract_strided_slice %119 {offsets = [5, 0], sizes = [1, 16], strides = [1, 1]} : vector<16x16xf32> to vector<1x16xf32>
    %157 = vector.broadcast %156 : vector<1x16xf32> to vector<8x16xf32>
    %158 = arith.mulf %1, %157 : vector<8x16xf32>
    %159 = vector.extract_strided_slice %125 {offsets = [0, 5], sizes = [8, 1], strides = [1, 1]} : vector<8x16xf32> to vector<8x1xf32>
    %160 = vector.broadcast %159 : vector<8x1xf32> to vector<8x16xf32>
    %161 = arith.mulf %158, %160 : vector<8x16xf32>
    %162 = vector.extract_strided_slice %119 {offsets = [6, 0], sizes = [1, 16], strides = [1, 1]} : vector<16x16xf32> to vector<1x16xf32>
    %163 = vector.broadcast %162 : vector<1x16xf32> to vector<8x16xf32>
    %164 = arith.mulf %1, %163 : vector<8x16xf32>
    %165 = vector.extract_strided_slice %125 {offsets = [0, 6], sizes = [8, 1], strides = [1, 1]} : vector<8x16xf32> to vector<8x1xf32>
    %166 = vector.broadcast %165 : vector<8x1xf32> to vector<8x16xf32>
    %167 = arith.mulf %164, %166 : vector<8x16xf32>
    %168 = vector.extract_strided_slice %119 {offsets = [7, 0], sizes = [1, 16], strides = [1, 1]} : vector<16x16xf32> to vector<1x16xf32>
    %169 = vector.broadcast %168 : vector<1x16xf32> to vector<8x16xf32>
    %170 = arith.mulf %1, %169 : vector<8x16xf32>
    %171 = vector.extract_strided_slice %125 {offsets = [0, 7], sizes = [8, 1], strides = [1, 1]} : vector<8x16xf32> to vector<8x1xf32>
    %172 = vector.broadcast %171 : vector<8x1xf32> to vector<8x16xf32>
    %173 = arith.mulf %170, %172 : vector<8x16xf32>
    %174 = vector.extract_strided_slice %119 {offsets = [8, 0], sizes = [1, 16], strides = [1, 1]} : vector<16x16xf32> to vector<1x16xf32>
    %175 = vector.broadcast %174 : vector<1x16xf32> to vector<8x16xf32>
    %176 = arith.mulf %1, %175 : vector<8x16xf32>
    %177 = vector.extract_strided_slice %125 {offsets = [0, 8], sizes = [8, 1], strides = [1, 1]} : vector<8x16xf32> to vector<8x1xf32>
    %178 = vector.broadcast %177 : vector<8x1xf32> to vector<8x16xf32>
    %179 = arith.mulf %176, %178 : vector<8x16xf32>
    %180 = vector.extract_strided_slice %119 {offsets = [9, 0], sizes = [1, 16], strides = [1, 1]} : vector<16x16xf32> to vector<1x16xf32>
    %181 = vector.broadcast %180 : vector<1x16xf32> to vector<8x16xf32>
    %182 = arith.mulf %1, %181 : vector<8x16xf32>
    %183 = vector.extract_strided_slice %125 {offsets = [0, 9], sizes = [8, 1], strides = [1, 1]} : vector<8x16xf32> to vector<8x1xf32>
    %184 = vector.broadcast %183 : vector<8x1xf32> to vector<8x16xf32>
    %185 = arith.mulf %182, %184 : vector<8x16xf32>
    %186 = vector.extract_strided_slice %119 {offsets = [10, 0], sizes = [1, 16], strides = [1, 1]} : vector<16x16xf32> to vector<1x16xf32>
    %187 = vector.broadcast %186 : vector<1x16xf32> to vector<8x16xf32>
    %188 = arith.mulf %1, %187 : vector<8x16xf32>
    %189 = vector.extract_strided_slice %125 {offsets = [0, 10], sizes = [8, 1], strides = [1, 1]} : vector<8x16xf32> to vector<8x1xf32>
    %190 = vector.broadcast %189 : vector<8x1xf32> to vector<8x16xf32>
    %191 = arith.mulf %188, %190 : vector<8x16xf32>
    %192 = vector.extract_strided_slice %119 {offsets = [11, 0], sizes = [1, 16], strides = [1, 1]} : vector<16x16xf32> to vector<1x16xf32>
    %193 = vector.broadcast %192 : vector<1x16xf32> to vector<8x16xf32>
    %194 = arith.mulf %1, %193 : vector<8x16xf32>
    %195 = vector.extract_strided_slice %125 {offsets = [0, 11], sizes = [8, 1], strides = [1, 1]} : vector<8x16xf32> to vector<8x1xf32>
    %196 = vector.broadcast %195 : vector<8x1xf32> to vector<8x16xf32>
    %197 = arith.mulf %194, %196 : vector<8x16xf32>
    %198 = vector.extract_strided_slice %119 {offsets = [12, 0], sizes = [1, 16], strides = [1, 1]} : vector<16x16xf32> to vector<1x16xf32>
    %199 = vector.broadcast %198 : vector<1x16xf32> to vector<8x16xf32>
    %200 = arith.mulf %1, %199 : vector<8x16xf32>
    %201 = vector.extract_strided_slice %125 {offsets = [0, 12], sizes = [8, 1], strides = [1, 1]} : vector<8x16xf32> to vector<8x1xf32>
    %202 = vector.broadcast %201 : vector<8x1xf32> to vector<8x16xf32>
    %203 = arith.mulf %200, %202 : vector<8x16xf32>
    %204 = vector.extract_strided_slice %119 {offsets = [13, 0], sizes = [1, 16], strides = [1, 1]} : vector<16x16xf32> to vector<1x16xf32>
    %205 = vector.broadcast %204 : vector<1x16xf32> to vector<8x16xf32>
    %206 = arith.mulf %1, %205 : vector<8x16xf32>
    %207 = vector.extract_strided_slice %125 {offsets = [0, 13], sizes = [8, 1], strides = [1, 1]} : vector<8x16xf32> to vector<8x1xf32>
    %208 = vector.broadcast %207 : vector<8x1xf32> to vector<8x16xf32>
    %209 = arith.mulf %206, %208 : vector<8x16xf32>
    %210 = vector.extract_strided_slice %119 {offsets = [14, 0], sizes = [1, 16], strides = [1, 1]} : vector<16x16xf32> to vector<1x16xf32>
    %211 = vector.broadcast %210 : vector<1x16xf32> to vector<8x16xf32>
    %212 = arith.mulf %1, %211 : vector<8x16xf32>
    %213 = vector.extract_strided_slice %125 {offsets = [0, 14], sizes = [8, 1], strides = [1, 1]} : vector<8x16xf32> to vector<8x1xf32>
    %214 = vector.broadcast %213 : vector<8x1xf32> to vector<8x16xf32>
    %215 = arith.mulf %212, %214 : vector<8x16xf32>
    %216 = vector.extract_strided_slice %119 {offsets = [15, 0], sizes = [1, 16], strides = [1, 1]} : vector<16x16xf32> to vector<1x16xf32>
    %217 = vector.broadcast %216 : vector<1x16xf32> to vector<8x16xf32>
    %218 = arith.mulf %1, %217 : vector<8x16xf32>
    %219 = vector.extract_strided_slice %125 {offsets = [0, 15], sizes = [8, 1], strides = [1, 1]} : vector<8x16xf32> to vector<8x1xf32>
    %220 = vector.broadcast %219 : vector<8x1xf32> to vector<8x16xf32>
    %221 = arith.mulf %218, %220 : vector<8x16xf32>
    %222 = tpu.concatenate %131, %137, %143, %149, %155, %161, %167, %173, %179, %185, %191, %197, %203, %209, %215, %221 in 1 : vector<8x16xf32>, vector<8x16xf32>, vector<8x16xf32>, vector<8x16xf32>, vector<8x16xf32>, vector<8x16xf32>, vector<8x16xf32>, vector<8x16xf32>, vector<8x16xf32>, vector<8x16xf32>, vector<8x16xf32>, vector<8x16xf32>, vector<8x16xf32>, vector<8x16xf32>, vector<8x16xf32>, vector<8x16xf32> -> vector<8x256xf32>
    %cst_16 = arith.constant dense<0.000000e+00> : vector<8x8xf32>
    %223 = tpu.matmul %222, %222, %cst_16 {dimension_numbers = #tpu.dot_dimension_numbers<[1], [1], [0], [0], [0, 0, 1, 0], [], []>} : vector<8x256xf32>, vector<8x256xf32>, vector<8x8xf32> -> vector<8x8xf32>
    %cst_17 = arith.constant 6.250000e-02 : f32
    %224 = vector.broadcast %cst_17 : f32 to vector<8x8xf32>
    %225 = arith.mulf %223, %224 : vector<8x8xf32>
    %cst_18 = arith.constant 0.000000e+00 : f32
    %226 = vector.broadcast %cst_18 : f32 to vector<8x8xf32>
    %227 = arith.cmpf ogt, %225, %226 : vector<8x8xf32>
    %cst_19 = arith.constant 0.000000e+00 : f32
    %228 = vector.broadcast %cst_19 : f32 to vector<8x8xf32>
    %229 = arith.select %227, %225, %228 : vector<8x8xi1>, vector<8x8xf32>
    %cst_20 = arith.constant dense<0.000000e+00> : vector<8xf32>
    %230 = vector.multi_reduction <add>, %229, %cst_20 [1] : vector<8x8xf32> to vector<8xf32>
    %231 = vector.shape_cast %230 : vector<8xf32> to vector<8x1xf32>
    %cst_21 = arith.constant 9.99999996E-13 : f32
    %232 = vector.broadcast %cst_21 : f32 to vector<8x1xf32>
    %233 = arith.maximumf %231, %232 : vector<8x1xf32>
    %234 = vector.broadcast %233 : vector<8x1xf32> to vector<8x8xf32>
    %235 = arith.divf %229, %234 : vector<8x8xf32>
    %c0_22 = arith.constant 0 : index
    %c0_23 = arith.constant 0 : index
    %236 = memref.load %arg0[%c0_22, %c0_23] : memref<2x1xf32, #tpu.memory_space<smem>>
    %c1 = arith.constant 1 : index
    %c0_24 = arith.constant 0 : index
    %237 = memref.load %arg0[%c1, %c0_24] : memref<2x1xf32, #tpu.memory_space<smem>>
    %238 = vector.broadcast %236 : f32 to vector<8x8xf32>
    %239 = arith.mulf %238, %118 : vector<8x8xf32>
    %240 = vector.broadcast %237 : f32 to vector<8x8xf32>
    %241 = arith.mulf %240, %235 : vector<8x8xf32>
    %242 = arith.addf %239, %241 : vector<8x8xf32>
    %243 = tpu.concatenate %0, %1 in 1 : vector<8x16xf32>, vector<8x16xf32> -> vector<8x32xf32>
    %c0_25 = arith.constant 0 : index
    %c0_26 = arith.constant 0 : index
    %244 = vector.load %arg5[%c0_25, %c0_26] : memref<32x32xf32, #tpu.memory_space<vmem>>, vector<32x32xf32>
    %cst_27 = arith.constant dense<0.000000e+00> : vector<8x32xf32>
    %245 = tpu.matmul %243, %244, %cst_27 {dimension_numbers = #tpu.dot_dimension_numbers<[1], [0], [0], [1], [0, 0, 1, 1], [], []>} : vector<8x32xf32>, vector<32x32xf32>, vector<8x32xf32> -> vector<8x32xf32>
    %cst_28 = arith.constant dense<0.000000e+00> : vector<8x32xf32>
    %246 = tpu.matmul %242, %245, %cst_28 {dimension_numbers = #tpu.dot_dimension_numbers<[1], [0], [0], [1], [0, 0, 1, 1], [], []>} : vector<8x8xf32>, vector<8x32xf32>, vector<8x32xf32> -> vector<8x32xf32>
    %c0_29 = arith.constant 0 : index
    %c0_30 = arith.constant 0 : index
    %247 = vector.load %arg6[%c0_29, %c0_30] : memref<1x32xf32, #tpu.memory_space<vmem>>, vector<1x32xf32>
    %248 = vector.broadcast %247 : vector<1x32xf32> to vector<8x32xf32>
    %249 = arith.addf %246, %248 : vector<8x32xf32>
    %cst_31 = arith.constant 0.000000e+00 : f32
    %250 = vector.broadcast %cst_31 : f32 to vector<8x32xf32>
    %251 = arith.maximumf %249, %250 : vector<8x32xf32>
    %c0_32 = arith.constant 0 : index
    %c0_33 = arith.constant 0 : index
    %252 = vector.load %arg7[%c0_32, %c0_33] : memref<32x32xf32, #tpu.memory_space<vmem>>, vector<32x32xf32>
    %cst_34 = arith.constant dense<0.000000e+00> : vector<8x32xf32>
    %253 = tpu.matmul %251, %252, %cst_34 {dimension_numbers = #tpu.dot_dimension_numbers<[1], [0], [0], [1], [0, 0, 1, 1], [], []>} : vector<8x32xf32>, vector<32x32xf32>, vector<8x32xf32> -> vector<8x32xf32>
    %cst_35 = arith.constant dense<0.000000e+00> : vector<8x32xf32>
    %254 = tpu.matmul %242, %253, %cst_35 {dimension_numbers = #tpu.dot_dimension_numbers<[1], [0], [0], [1], [0, 0, 1, 1], [], []>} : vector<8x8xf32>, vector<8x32xf32>, vector<8x32xf32> -> vector<8x32xf32>
    %c0_36 = arith.constant 0 : index
    %c0_37 = arith.constant 0 : index
    %255 = vector.load %arg8[%c0_36, %c0_37] : memref<1x32xf32, #tpu.memory_space<vmem>>, vector<1x32xf32>
    %256 = vector.broadcast %255 : vector<1x32xf32> to vector<8x32xf32>
    %257 = arith.addf %254, %256 : vector<8x32xf32>
    %258 = arith.addf %251, %257 : vector<8x32xf32>
    %cst_38 = arith.constant 5.000000e-01 : f32
    %259 = vector.broadcast %cst_38 : f32 to vector<8x32xf32>
    %260 = arith.mulf %258, %259 : vector<8x32xf32>
    %c0_39 = arith.constant 0 : index
    %c0_40 = arith.constant 0 : index
    %261 = vector.load %arg9[%c0_39, %c0_40] : memref<32x32xf32, #tpu.memory_space<vmem>>, vector<32x32xf32>
    %cst_41 = arith.constant dense<0.000000e+00> : vector<8x32xf32>
    %262 = tpu.matmul %260, %261, %cst_41 {dimension_numbers = #tpu.dot_dimension_numbers<[1], [0], [0], [1], [0, 0, 1, 1], [], []>} : vector<8x32xf32>, vector<32x32xf32>, vector<8x32xf32> -> vector<8x32xf32>
    %c0_42 = arith.constant 0 : index
    %c0_43 = arith.constant 0 : index
    %263 = vector.load %arg10[%c0_42, %c0_43] : memref<1x32xf32, #tpu.memory_space<vmem>>, vector<1x32xf32>
    %264 = vector.broadcast %263 : vector<1x32xf32> to vector<8x32xf32>
    %265 = arith.addf %262, %264 : vector<8x32xf32>
    %cst_44 = arith.constant 0.000000e+00 : f32
    %266 = vector.broadcast %cst_44 : f32 to vector<8x32xf32>
    %267 = arith.maximumf %265, %266 : vector<8x32xf32>
    %c0_45 = arith.constant 0 : index
    %c0_46 = arith.constant 0 : index
    %268 = vector.load %arg11[%c0_45, %c0_46] : memref<32x16xf32, #tpu.memory_space<vmem>>, vector<32x16xf32>
    %cst_47 = arith.constant dense<0.000000e+00> : vector<8x16xf32>
    %269 = tpu.matmul %267, %268, %cst_47 {dimension_numbers = #tpu.dot_dimension_numbers<[1], [0], [0], [1], [0, 0, 1, 1], [], []>} : vector<8x32xf32>, vector<32x16xf32>, vector<8x16xf32> -> vector<8x16xf32>
    %c0_48 = arith.constant 0 : index
    %c0_49 = arith.constant 0 : index
    %270 = vector.load %arg12[%c0_48, %c0_49] : memref<1x16xf32, #tpu.memory_space<vmem>>, vector<1x16xf32>
    %271 = vector.broadcast %270 : vector<1x16xf32> to vector<8x16xf32>
    %272 = arith.addf %269, %271 : vector<8x16xf32>
    %273 = vector.extract_strided_slice %272 {offsets = [0, 0], sizes = [8, 8], strides = [1, 1]} : vector<8x16xf32> to vector<8x8xf32>
    %c0_50 = arith.constant 0 : index
    %c0_51 = arith.constant 0 : index
    %274 = vector.load %arg13[%c0_50, %c0_51] : memref<8x8xf32, #tpu.memory_space<vmem>>, vector<8x8xf32>
    tpu.vector_store %arg13[%c0_50, %c0_51], %273 {strides = array<i32>} : memref<8x8xf32, #tpu.memory_space<vmem>>, vector<8x8xf32>,
    %275 = vector.extract_strided_slice %272 {offsets = [0, 8], sizes = [8, 8], strides = [1, 1]} : vector<8x16xf32> to vector<8x8xf32>
    %c0_52 = arith.constant 0 : index
    %c0_53 = arith.constant 0 : index
    %276 = vector.load %arg14[%c0_52, %c0_53] : memref<8x8xf32, #tpu.memory_space<vmem>>, vector<8x8xf32>
    tpu.vector_store %arg14[%c0_52, %c0_53], %275 {strides = array<i32>} : memref<8x8xf32, #tpu.memory_space<vmem>>, vector<8x8xf32>,
    return
  }
}

</mosaic_0001>

<llo_original>
// kernel: tpu_custom_call.1
$region0: #{tpu_custom_call.1}
  #allocation0 [shape = 'u32[]', space=smem, size = 0x4, offset = 0x4, fixed_abs, tag = 'smem constant byte address 0x4 - core index']
  #allocation1 [shape = 'u32[144,128]{1,0:T(1,128)}', space=vmem, size = 0x12000, scoped, tag = 'internal scratch']
  %s0 = inlined_call_operand.vmem [shape: f32[2,1], index: 0, kind: input, shape index: {}]
  %s1 = inlined_call_operand.hbm [shape: f32[8,16], index: 1, kind: input, shape index: {}]
  %s2 = inlined_call_operand.hbm [shape: f32[8,16], index: 2, kind: input, shape index: {}]
  %s3 = inlined_call_operand.hbm [shape: f32[16,16], index: 3, kind: input, shape index: {}]
  %s4 = inlined_call_operand.hbm [shape: f32[16,16], index: 4, kind: input, shape index: {}]
  %s5 = inlined_call_operand.vmem [shape: f32[32,32], index: 5, kind: input, shape index: {}]
  %s6 = inlined_call_operand.vmem [shape: f32[1,32], index: 6, kind: input, shape index: {}]
  %s7 = inlined_call_operand.vmem [shape: f32[32,32], index: 7, kind: input, shape index: {}]
  %s8 = inlined_call_operand.vmem [shape: f32[1,32], index: 8, kind: input, shape index: {}]
  %s9 = inlined_call_operand.hbm [shape: f32[32,32], index: 9, kind: input, shape index: {}]
  %s10 = inlined_call_operand.vmem [shape: f32[1,32], index: 10, kind: input, shape index: {}]
  %s11 = inlined_call_operand.vmem [shape: f32[32,16], index: 11, kind: input, shape index: {}]
  %s12 = inlined_call_operand.vmem [shape: f32[1,16], index: 12, kind: input, shape index: {}]
  %s13 = inlined_call_operand.hbm [shape: f32[8,8], index: 13, kind: output, shape index: {0}]
  %s14 = inlined_call_operand.hbm [shape: f32[8,8], index: 14, kind: output, shape index: {1}]
  %15 = xla_tuple %s13, %s14
  %s16 = sld [smem:[#allocation0]]
  $region94: #{tpu_custom_call.1} parent=0
    _
  %s18 = ssub.s32 1, %s16
  %s19 = scalar_select 0, %s18, %s16
  $region1: #{tpu_custom_call.1} parent=0
    #allocation2 [shape = 'u8[1024]{0}', space=smem, size = 0x400, scoped, tag = 'input window, operand 0, single buffered']
    #allocation3 [shape = 's32[1]{0}', space=sflag, size = 0x4, scoped, tag = 'scoped memory for tpu_custom_call.1']
    #allocation4 [shape = 's32[1]{0}', space=sflag, size = 0x4, scoped, tag = 'scoped memory for tpu_custom_call.1']
    #allocation5 [shape = 's32[1]{0}', space=sflag, size = 0x4, scoped, tag = 'scoped memory for tpu_custom_call.1']
    #allocation6 [shape = 'u8[4096]{0}', space=vmem, size = 0x1000, scoped, tag = 'input window, operand 1, single buffered']
    #allocation7 [shape = 'u8[4096]{0}', space=vmem, size = 0x1000, scoped, tag = 'input window, operand 2, single buffered']
    #allocation8 [shape = 's32[1]{0}', space=sflag, size = 0x4, scoped, tag = 'scoped memory for tpu_custom_call.1']
    #allocation9 [shape = 'u8[8192]{0}', space=vmem, size = 0x2000, scoped, tag = 'input window, operand 3, single buffered']
    #allocation10 [shape = 'u8[8192]{0}', space=vmem, size = 0x2000, scoped, tag = 'input window, operand 4, single buffered']
    #allocation11 [shape = 's32[1]{0}', space=sflag, size = 0x4, scoped, tag = 'scoped memory for tpu_custom_call.1']
    #allocation12 [shape = 'u8[16384]{0}', space=vmem, size = 0x4000, scoped, tag = 'input window, operand 9, single buffered']
    #allocation13 [shape = 'u8[4096]{0}', space=vmem, size = 0x1000, scoped, tag = 'output window, operand 0, single buffered']
    #allocation14 [shape = 'u8[4096]{0}', space=vmem, size = 0x1000, scoped, tag = 'output window, operand 1, single buffered']
    #allocation15 [shape = 's32[1]{0}', space=sflag, size = 0x4, scoped, tag = 'scoped memory for tpu_custom_call.1']
    %20 = vsyncpa [#allocation5], 0
    %21 = vsyncpa [#allocation3], 0
    %22 = vsyncpa [#allocation8], 0
    %23 = vsyncpa [#allocation11], 0
    %24 = vsyncpa [#allocation4], 0
    %25 = vsyncpa [#allocation15], 0
    // Predicated region
    $region2: #{tpu_custom_call.1} parent=1 // pred_check
      _
    $region3: #{tpu_custom_call.1} parent=1 // pred_check_branch
      %27 = sbr.rel (0) target = $region5
    $region4: #{tpu_custom_call.1} parent=1 // pred_region
      %s29 = ssub.s32 32, 32
      %30 = vsyncadd [#allocation5], %s29
      %s32 = sshll.u32 %s0, 4
      %s33 = int_to_ptr.vmem [resolvable:$true] %s32
      %35 = dma.vmem_to_smem %s33, 32, [#allocation2], [#allocation5]
    $region5: #{tpu_custom_call.1} parent=1 // pred_fallthru
      _
    // Predicated region
    $region6: #{tpu_custom_call.1} parent=1 // pred_check
      _
    $region7: #{tpu_custom_call.1} parent=1 // pred_check_branch
      %37 = sbr.rel (0) target = $region9
    $region8: #{tpu_custom_call.1} parent=1 // pred_region
      %s39 = ssub.s32 128, 128
      %40 = vsyncadd [#allocation3], %s39
      %s42 = sshll.u32 [#allocation6], 4
      %s43 = int_to_ptr.vmem [resolvable:$true] %s42
      %45 = dma.hbm_to_vmem [thread:$0]  %s1, 128, %s43, [#allocation3]
    $region9: #{tpu_custom_call.1} parent=1 // pred_fallthru
      _
    // Predicated region
    $region10: #{tpu_custom_call.1} parent=1 // pred_check
      _
    $region11: #{tpu_custom_call.1} parent=1 // pred_check_branch
      %47 = sbr.rel (0) target = $region13
    $region12: #{tpu_custom_call.1} parent=1 // pred_region
      %s49 = ssub.s32 128, 128
      %50 = vsyncadd [#allocation8], %s49
      %s52 = sshll.u32 [#allocation7], 4
      %s53 = int_to_ptr.vmem [resolvable:$true] %s52
      %55 = dma.hbm_to_vmem [thread:$0]  %s2, 128, %s53, [#allocation8]
    $region13: #{tpu_custom_call.1} parent=1 // pred_fallthru
      _
    // Predicated region
    $region14: #{tpu_custom_call.1} parent=1 // pred_check
      _
    $region15: #{tpu_custom_call.1} parent=1 // pred_check_branch
      %57 = sbr.rel (0) target = $region17
    $region16: #{tpu_custom_call.1} parent=1 // pred_region
      %s59 = ssub.s32 256, 256
      %60 = vsyncadd [#allocation8], %s59
      %s61 = sshll.u32 [#allocation9], 4
      %s62 = int_to_ptr.vmem [resolvable:$true] %s61
      %67 = dma.hbm_to_vmem [thread:$0]  %s3, 256, %s62, [#allocation8], 128, 128, 8
    $region17: #{tpu_custom_call.1} parent=1 // pred_fallthru
      _
    // Predicated region
    $region18: #{tpu_custom_call.1} parent=1 // pred_check
      _
    $region19: #{tpu_custom_call.1} parent=1 // pred_check_branch
      %69 = sbr.rel (0) target = $region21
    $region20: #{tpu_custom_call.1} parent=1 // pred_region
      %s71 = ssub.s32 256, 256
      %72 = vsyncadd [#allocation11], %s71
      %s73 = sshll.u32 [#allocation10], 4
      %s74 = int_to_ptr.vmem [resolvable:$true] %s73
      %79 = dma.hbm_to_vmem [thread:$0]  %s4, 256, %s74, [#allocation11], 128, 128, 8
    $region21: #{tpu_custom_call.1} parent=1 // pred_fallthru
      _
    // Predicated region
    $region22: #{tpu_custom_call.1} parent=1 // pred_check
      _
    $region23: #{tpu_custom_call.1} parent=1 // pred_check_branch
      %81 = sbr.rel (0) target = $region25
    $region24: #{tpu_custom_call.1} parent=1 // pred_region
      _
    $region25: #{tpu_custom_call.1} parent=1 // pred_fallthru
      _
    // Predicated region
    $region26: #{tpu_custom_call.1} parent=1 // pred_check
      _
    $region27: #{tpu_custom_call.1} parent=1 // pred_check_branch
      %83 = sbr.rel (0) target = $region29
    $region28: #{tpu_custom_call.1} parent=1 // pred_region
      _
    $region29: #{tpu_custom_call.1} parent=1 // pred_fallthru
      _
    // Predicated region
    $region30: #{tpu_custom_call.1} parent=1 // pred_check
      _
    $region31: #{tpu_custom_call.1} parent=1 // pred_check_branch
      %85 = sbr.rel (0) target = $region33
    $region32: #{tpu_custom_call.1} parent=1 // pred_region
      _
    $region33: #{tpu_custom_call.1} parent=1 // pred_fallthru
      _
    // Predicated region
    $region34: #{tpu_custom_call.1} parent=1 // pred_check
      _
    $region35: #{tpu_custom_call.1} parent=1 // pred_check_branch
      %87 = sbr.rel (0) target = $region37
    $region36: #{tpu_custom_call.1} parent=1 // pred_region
      _
    $region37: #{tpu_custom_call.1} parent=1 // pred_fallthru
      _
    // Predicated region
    $region38: #{tpu_custom_call.1} parent=1 // pred_check
      _
    $region39: #{tpu_custom_call.1} parent=1 // pred_check_branch
      %89 = sbr.rel (0) target = $region41
    $region40: #{tpu_custom_call.1} parent=1 // pred_region
      %s91 = ssub.s32 512, 512
      %92 = vsyncadd [#allocation11], %s91
      %s93 = sshll.u32 [#allocation12], 4
      %s94 = int_to_ptr.vmem [resolvable:$true] %s93
      %99 = dma.hbm_to_vmem [thread:$0]  %s9, 512, %s94, [#allocation11], 128, 128, 8
    $region41: #{tpu_custom_call.1} parent=1 // pred_fallthru
      _
    // Predicated region
    $region42: #{tpu_custom_call.1} parent=1 // pred_check
      _
    $region43: #{tpu_custom_call.1} parent=1 // pred_check_branch
      %101 = sbr.rel (0) target = $region45
    $region44: #{tpu_custom_call.1} parent=1 // pred_region
      _
    $region45: #{tpu_custom_call.1} parent=1 // pred_fallthru
      _
    // Predicated region
    $region46: #{tpu_custom_call.1} parent=1 // pred_check
      _
    $region47: #{tpu_custom_call.1} parent=1 // pred_check_branch
      %103 = sbr.rel (0) target = $region49
    $region48: #{tpu_custom_call.1} parent=1 // pred_region
      _
    $region49: #{tpu_custom_call.1} parent=1 // pred_fallthru
      _
    // Predicated region
    $region50: #{tpu_custom_call.1} parent=1 // pred_check
      _
    $region51: #{tpu_custom_call.1} parent=1 // pred_check_branch
      %105 = sbr.rel (0) target = $region53
    $region52: #{tpu_custom_call.1} parent=1 // pred_region
      _
    $region53: #{tpu_custom_call.1} parent=1 // pred_fallthru
      _
    // Predicated region
    $region54: #{tpu_custom_call.1} parent=1 // pred_check
      _
    $region55: #{tpu_custom_call.1} parent=1 // pred_check_branch
      %107 = sbr.rel (0) target = $region57
    $region56: #{tpu_custom_call.1} parent=1 // pred_region
      %108 = dma.done [#allocation5], 32
    $region57: #{tpu_custom_call.1} parent=1 // pred_fallthru
      _
    // Predicated region
    $region58: #{tpu_custom_call.1} parent=1 // pred_check
      _
    $region59: #{tpu_custom_call.1} parent=1 // pred_check_branch
      %110 = sbr.rel (0) target = $region61
    $region60: #{tpu_custom_call.1} parent=1 // pred_region
      %111 = dma.done [#allocation3], 128
    $region61: #{tpu_custom_call.1} parent=1 // pred_fallthru
      _
    // Predicated region
    $region62: #{tpu_custom_call.1} parent=1 // pred_check
      _
    $region63: #{tpu_custom_call.1} parent=1 // pred_check_branch
      %113 = sbr.rel (0) target = $region65
    $region64: #{tpu_custom_call.1} parent=1 // pred_region
      %114 = dma.done [#allocation8], 128
    $region65: #{tpu_custom_call.1} parent=1 // pred_fallthru
      _
    // Predicated region
    $region66: #{tpu_custom_call.1} parent=1 // pred_check
      _
    $region67: #{tpu_custom_call.1} parent=1 // pred_check_branch
      %116 = sbr.rel (0) target = $region69
    $region68: #{tpu_custom_call.1} parent=1 // pred_region
      %117 = dma.done [#allocation8], 256
    $region69: #{tpu_custom_call.1} parent=1 // pred_fallthru
      _
    // Predicated region
    $region70: #{tpu_custom_call.1} parent=1 // pred_check
      _
    $region71: #{tpu_custom_call.1} parent=1 // pred_check_branch
      %119 = sbr.rel (0) target = $region73
    $region72: #{tpu_custom_call.1} parent=1 // pred_region
      %120 = dma.done [#allocation11], 256
    $region73: #{tpu_custom_call.1} parent=1 // pred_fallthru
      _
    // Predicated region
    $region74: #{tpu_custom_call.1} parent=1 // pred_check
      _
    $region75: #{tpu_custom_call.1} parent=1 // pred_check_branch
      %122 = sbr.rel (0) target = $region77
    $region76: #{tpu_custom_call.1} parent=1 // pred_region
      %123 = dma.done [#allocation11], 512
    $region77: #{tpu_custom_call.1} parent=1 // pred_fallthru
      _
    %124 = sfence
    %v125 = vld [vmem:[#allocation6] sm:$0xff]
    %v126 = vld [vmem:[#allocation7] sm:$0xff]
    %v127 = vld [vmem:[#allocation9] sm:$0xff]
    %v128 = vld [vmem:[#allocation9 + $0x8] sm:$0xff]
    %v129 = vmul.f32 %v125, %v125
    %v130 = vmul.f32 %v127, %v127
    %v131 = vmul.f32 %v128, %v128
    %vm132 = vcmask 130048
    %v134 = vsel %vm132, %v129, 0
    %v137 = vsel %vm132, %v130, 0
    %v140 = vsel %vm132, %v131, 0
    %142 = vmatprep.subr.mxu0 0.0
    %143 = vmatpush1.xpose.msra.mxu0 %v137
    %144 = vmatprep.subr.mxu0 0.0
    %145 = vmatpush1.xpose.msra.mxu0 %v140
    %146 = vmatprep.subr.mxu0 0.0
    %147 = vmatpush1.xpose.msra.mxu0 0.0
    %148 = vmatprep.subr.mxu0 0.0
    %149 = vmatpush1.xpose.msra.mxu0 0.0
    %150 = vmatprep.subr.mxu0 0.0
    %151 = vmatpush1.xpose.msra.mxu0 0.0
    %152 = vmatprep.subr.mxu0 0.0
    %153 = vmatpush1.xpose.msra.mxu0 0.0
    %154 = vmatprep.subr.mxu0 0.0
    %155 = vmatpush1.xpose.msra.mxu0 0.0
    %156 = vmatprep.subr.mxu0 0.0
    %157 = vmatpush1.xpose.msra.mxu0 0.0
    %158 = vmatprep.subr.mxu0 0.0
    %159 = vmatpush1.xpose.msra.mxu0 0.0
    %160 = vmatprep.subr.mxu0 0.0
    %161 = vmatpush1.xpose.msra.mxu0 0.0
    %162 = vmatprep.subr.mxu0 0.0
    %163 = vmatpush1.xpose.msra.mxu0 0.0
    %164 = vmatprep.subr.mxu0 0.0
    %165 = vmatpush1.xpose.msra.mxu0 0.0
    %166 = vmatprep.subr.mxu0 0.0
    %167 = vmatpush1.xpose.msra.mxu0 0.0
    %168 = vmatprep.subr.mxu0 0.0
    %169 = vmatpush1.xpose.msra.mxu0 0.0
    %170 = vmatprep.subr.mxu0 0.0
    %171 = vmatpush1.xpose.msra.mxu0 0.0
    %172 = vmatprep.subr.mxu0 0.0
    %173 = vmatpush1.xpose.msra.mxu0 0.0
    %174 = vmatprep.subr.mxu0 0.0
    %175 = vmatpush1.xpose.msra.mxu0 0.0
    %176 = vmatprep.subr.mxu0 0.0
    %177 = vmatpush1.xpose.msra.mxu0 0.0
    %178 = vmatprep.subr.mxu0 0.0
    %179 = vmatpush1.xpose.msra.mxu0 0.0
    %180 = vmatprep.subr.mxu0 0.0
    %181 = vmatpush1.xpose.msra.mxu0 0.0
    %182 = vmatprep.subr.mxu0 0.0
    %183 = vmatpush1.xpose.msra.mxu0 0.0
    %184 = vmatprep.subr.mxu0 0.0
    %185 = vmatpush1.xpose.msra.mxu0 0.0
    %186 = vmatprep.subr.mxu0 0.0
    %187 = vmatpush1.xpose.msra.mxu0 0.0
    %188 = vmatprep.subr.mxu0 0.0
    %189 = vmatpush1.xpose.msra.mxu0 0.0
    %190 = vmatprep.subr.mxu0 0.0
    %191 = vmatpush1.xpose.msra.mxu0 0.0
    %192 = vmatprep.subr.mxu0 0.0
    %193 = vmatpush1.xpose.msra.mxu0 0.0
    %194 = vmatprep.subr.mxu0 0.0
    %195 = vmatpush1.xpose.msra.mxu0 0.0
    %196 = vmatprep.subr.mxu0 0.0
    %197 = vmatpush1.xpose.msra.mxu0 0.0
    %198 = vmatprep.subr.mxu0 0.0
    %199 = vmatpush1.xpose.msra.mxu0 0.0
    %200 = vmatprep.subr.mxu0 0.0
    %201 = vmatpush1.xpose.msra.mxu0 0.0
    %202 = vmatprep.subr.mxu0 0.0
    %203 = vmatpush1.xpose.msra.mxu0 0.0
    %204 = vmatprep.subr.mxu0 0.0
    %205 = vmatpush1.xpose.msra.mxu0 0.0
    %206 = vmatprep.mubr.f32.mxu0 0.0
    %207 = vmatmul.mubr.f32.gmra.mrb[0].mxu0 %v134
    %v208 = vpop.f32.mrb[0].mxu0
    %v209 = vadd.f32 0.0, %v208
    %v210 = vpop.f32.mrb[0].mxu0
    %211 = vdwg.mxu0
    %v212 = vmax.f32 %v209, 1e-24
    %v213 = vrsqrt.pop %v212
    %v214 = vlaneseq
    %v215 = vshrl.u32 %v214, 7
    %v216 = vsub.s32 0, %v215
    %v217 = vrot.slane %v127, %v216
    %v218 = vmul.f32 %v125, %v217
    %220 = vset.pattern.permute.xlu0 0
    %221 = vperm.xlu0 %220, %v213
    %v222 = vpop.permute.xlu0 %221
    %v224 = vmul.f32 %v218, %v222
    %v225 = vlaneseq
    %v226 = vshrl.u32 %v225, 7
    %v227 = vsub.s32 1, %v226
    %v228 = vrot.slane %v127, %v227
    %v229 = vmul.f32 %v125, %v228
    %230 = vset.pattern.permute.xlu0 1
    %231 = vperm.xlu0 %230, %v213
    %v232 = vpop.permute.xlu0 %231
    %v234 = vmul.f32 %v229, %v232
    %v235 = vlaneseq
    %v236 = vshrl.u32 %v235, 7
    %v237 = vsub.s32 2, %v236
    %v238 = vrot.slane %v127, %v237
    %v239 = vmul.f32 %v125, %v238
    %240 = vset.pattern.permute.xlu0 2
    %241 = vperm.xlu0 %240, %v213
    %v242 = vpop.permute.xlu0 %241
    %v244 = vmul.f32 %v239, %v242
    %v245 = vlaneseq
    %v246 = vshrl.u32 %v245, 7
    %v247 = vsub.s32 3, %v246
    %v248 = vrot.slane %v127, %v247
    %v249 = vmul.f32 %v125, %v248
    %250 = vset.pattern.permute.xlu0 3
    %251 = vperm.xlu0 %250, %v213
    %v252 = vpop.permute.xlu0 %251
    %v254 = vmul.f32 %v249, %v252
    %v255 = vlaneseq
    %v256 = vshrl.u32 %v255, 7
    %v257 = vsub.s32 4, %v256
    %v258 = vrot.slane %v127, %v257
    %v259 = vmul.f32 %v125, %v258
    %260 = vset.pattern.permute.xlu0 4
    %261 = vperm.xlu0 %260, %v213
    %v262 = vpop.permute.xlu0 %261
    %v264 = vmul.f32 %v259, %v262
    %v265 = vlaneseq
    %v266 = vshrl.u32 %v265, 7
    %v267 = vsub.s32 5, %v266
    %v268 = vrot.slane %v127, %v267
    %v269 = vmul.f32 %v125, %v268
    %270 = vset.pattern.permute.xlu0 5
    %271 = vperm.xlu0 %270, %v213
    %v272 = vpop.permute.xlu0 %271
    %v274 = vmul.f32 %v269, %v272
    %v275 = vlaneseq
    %v276 = vshrl.u32 %v275, 7
    %v277 = vsub.s32 6, %v276
    %v278 = vrot.slane %v127, %v277
    %v279 = vmul.f32 %v125, %v278
    %280 = vset.pattern.permute.xlu0 6
    %281 = vperm.xlu0 %280, %v213
    %v282 = vpop.permute.xlu0 %281
    %v284 = vmul.f32 %v279, %v282
    %v285 = vlaneseq
    %v286 = vshrl.u32 %v285, 7
    %v287 = vsub.s32 7, %v286
    %v288 = vrot.slane %v127, %v287
    %v289 = vmul.f32 %v125, %v288
    %290 = vset.pattern.permute.xlu0 7
    %291 = vperm.xlu0 %290, %v213
    %v292 = vpop.permute.xlu0 %291
    %v294 = vmul.f32 %v289, %v292
    %v295 = vlaneseq
    %v296 = vshrl.u32 %v295, 7
    %v297 = vsub.s32 0, %v296
    %v298 = vrot.slane %v128, %v297
    %v299 = vmul.f32 %v125, %v298
    %300 = vset.pattern.permute.xlu0 8
    %301 = vperm.xlu0 %300, %v213
    %v302 = vpop.permute.xlu0 %301
    %v304 = vmul.f32 %v299, %v302
    %v305 = vlaneseq
    %v306 = vshrl.u32 %v305, 7
    %v307 = vsub.s32 1, %v306
    %v308 = vrot.slane %v128, %v307
    %v309 = vmul.f32 %v125, %v308
    %310 = vset.pattern.permute.xlu0 9
    %311 = vperm.xlu0 %310, %v213
    %v312 = vpop.permute.xlu0 %311
    %v314 = vmul.f32 %v309, %v312
    %v315 = vlaneseq
    %v316 = vshrl.u32 %v315, 7
    %v317 = vsub.s32 2, %v316
    %v318 = vrot.slane %v128, %v317
    %v319 = vmul.f32 %v125, %v318
    %320 = vset.pattern.permute.xlu0 10
    %321 = vperm.xlu0 %320, %v213
    %v322 = vpop.permute.xlu0 %321
    %v324 = vmul.f32 %v319, %v322
    %v325 = vlaneseq
    %v326 = vshrl.u32 %v325, 7
    %v327 = vsub.s32 3, %v326
    %v328 = vrot.slane %v128, %v327
    %v329 = vmul.f32 %v125, %v328
    %330 = vset.pattern.permute.xlu0 11
    %331 = vperm.xlu0 %330, %v213
    %v332 = vpop.permute.xlu0 %331
    %v334 = vmul.f32 %v329, %v332
    %v335 = vlaneseq
    %v336 = vshrl.u32 %v335, 7
    %v337 = vsub.s32 4, %v336
    %v338 = vrot.slane %v128, %v337
    %v339 = vmul.f32 %v125, %v338
    %340 = vset.pattern.permute.xlu0 12
    %341 = vperm.xlu0 %340, %v213
    %v342 = vpop.permute.xlu0 %341
    %v344 = vmul.f32 %v339, %v342
    %v345 = vlaneseq
    %v346 = vshrl.u32 %v345, 7
    %v347 = vsub.s32 5, %v346
    %v348 = vrot.slane %v128, %v347
    %v349 = vmul.f32 %v125, %v348
    %350 = vset.pattern.permute.xlu0 13
    %351 = vperm.xlu0 %350, %v213
    %v352 = vpop.permute.xlu0 %351
    %v354 = vmul.f32 %v349, %v352
    %v355 = vlaneseq
    %v356 = vshrl.u32 %v355, 7
    %v357 = vsub.s32 6, %v356
    %v358 = vrot.slane %v128, %v357
    %v359 = vmul.f32 %v125, %v358
    %360 = vset.pattern.permute.xlu0 14
    %361 = vperm.xlu0 %360, %v213
    %v362 = vpop.permute.xlu0 %361
    %v364 = vmul.f32 %v359, %v362
    %v365 = vlaneseq
    %v366 = vshrl.u32 %v365, 7
    %v367 = vsub.s32 7, %v366
    %v368 = vrot.slane %v128, %v367
    %v369 = vmul.f32 %v125, %v368
    %370 = vset.pattern.permute.xlu0 15
    %371 = vperm.xlu0 %370, %v213
    %v372 = vpop.permute.xlu0 %371
    %v374 = vmul.f32 %v369, %v372
    %376 = vrot.lane.b32.xlu0 %v234, 16
    %v377 = vpop.permute.xlu0 %376
    %380 = vrot.lane.b32.xlu0 %v244, 32
    %v381 = vpop.permute.xlu0 %380
    %384 = vrot.lane.b32.xlu0 %v254, 48
    %v385 = vpop.permute.xlu0 %384
    %388 = vrot.lane.b32.xlu0 %v264, 64
    %v389 = vpop.permute.xlu0 %388
    %392 = vrot.lane.b32.xlu0 %v274, 80
    %v393 = vpop.permute.xlu0 %392
    %396 = vrot.lane.b32.xlu0 %v284, 96
    %v397 = vpop.permute.xlu0 %396
    %400 = vrot.lane.b32.xlu0 %v294, 112
    %v401 = vpop.permute.xlu0 %400
    %404 = vrot.lane.b32.xlu0 %v314, 16
    %v405 = vpop.permute.xlu0 %404
    %408 = vrot.lane.b32.xlu0 %v324, 32
    %v409 = vpop.permute.xlu0 %408
    %412 = vrot.lane.b32.xlu0 %v334, 48
    %v413 = vpop.permute.xlu0 %412
    %416 = vrot.lane.b32.xlu0 %v344, 64
    %v417 = vpop.permute.xlu0 %416
    %420 = vrot.lane.b32.xlu0 %v354, 80
    %v421 = vpop.permute.xlu0 %420
    %424 = vrot.lane.b32.xlu0 %v364, 96
    %v425 = vpop.permute.xlu0 %424
    %428 = vrot.lane.b32.xlu0 %v374, 112
    %v429 = vpop.permute.xlu0 %428
    %v431 = vsel %vm132, %v224, %v377
    %vm432 = vcmask 261120
    %v433 = vsel %vm432, %v431, %v381
    %vm434 = vcmask 392192
    %v435 = vsel %vm434, %v433, %v385
    %vm436 = vcmask 523264
    %v437 = vsel %vm436, %v435, %v389
    %vm438 = vcmask 654336
    %v439 = vsel %vm438, %v437, %v393
    %vm440 = vcmask 785408
    %v441 = vsel %vm440, %v439, %v397
    %vm442 = vcmask 916480
    %v443 = vsel %vm442, %v441, %v401
    %v444 = vsel %vm132, %v304, %v405
    %v445 = vsel %vm432, %v444, %v409
    %v446 = vsel %vm434, %v445, %v413
    %v447 = vsel %vm436, %v446, %v417
    %v448 = vsel %vm438, %v447, %v421
    %v449 = vsel %vm440, %v448, %v425
    %v450 = vsel %vm442, %v449, %v429
    %451 = vmatprep.subr.mxu0 %v450
    %452 = vmatpush1.xpose.msra.mxu0 %v443
    %453 = vmatprep.subr.mxu0 0.0
    %454 = vmatpush1.xpose.msra.mxu0 0.0
    %455 = vmatprep.subr.mxu0 0.0
    %456 = vmatpush1.xpose.msra.mxu0 0.0
    %457 = vmatprep.subr.mxu0 0.0
    %458 = vmatpush1.xpose.msra.mxu0 0.0
    %459 = vmatprep.subr.mxu0 0.0
    %460 = vmatpush1.xpose.msra.mxu0 0.0
    %461 = vmatprep.subr.mxu0 0.0
    %462 = vmatpush1.xpose.msra.mxu0 0.0
    %463 = vmatprep.subr.mxu0 0.0
    %464 = vmatpush1.xpose.msra.mxu0 0.0
    %465 = vmatprep.subr.mxu0 0.0
    %466 = vmatpush1.xpose.msra.mxu0 0.0
    %467 = vmatprep.subr.mxu0 0.0
    %468 = vmatpush1.xpose.msra.mxu0 0.0
    %469 = vmatprep.subr.mxu0 0.0
    %470 = vmatpush1.xpose.msra.mxu0 0.0
    %471 = vmatprep.subr.mxu0 0.0
    %472 = vmatpush1.xpose.msra.mxu0 0.0
    %473 = vmatprep.subr.mxu0 0.0
    %474 = vmatpush1.xpose.msra.mxu0 0.0
    %475 = vmatprep.subr.mxu0 0.0
    %476 = vmatpush1.xpose.msra.mxu0 0.0
    %477 = vmatprep.subr.mxu0 0.0
    %478 = vmatpush1.xpose.msra.mxu0 0.0
    %479 = vmatprep.subr.mxu0 0.0
    %480 = vmatpush1.xpose.msra.mxu0 0.0
    %481 = vmatprep.subr.mxu0 0.0
    %482 = vmatpush1.xpose.msra.mxu0 0.0
    %483 = vmatprep.subr.mxu0 0.0
    %484 = vmatpush1.xpose.msra.mxu0 0.0
    %485 = vmatprep.subr.mxu0 0.0
    %486 = vmatpush1.xpose.msra.mxu0 0.0
    %487 = vmatprep.subr.mxu0 0.0
    %488 = vmatpush1.xpose.msra.mxu0 0.0
    %489 = vmatprep.subr.mxu0 0.0
    %490 = vmatpush1.xpose.msra.mxu0 0.0
    %491 = vmatprep.subr.mxu0 0.0
    %492 = vmatpush1.xpose.msra.mxu0 0.0
    %493 = vmatprep.subr.mxu0 0.0
    %494 = vmatpush1.xpose.msra.mxu0 0.0
    %495 = vmatprep.subr.mxu0 0.0
    %496 = vmatpush1.xpose.msra.mxu0 0.0
    %497 = vmatprep.subr.mxu0 0.0
    %498 = vmatpush1.xpose.msra.mxu0 0.0
    %499 = vmatprep.subr.mxu0 0.0
    %500 = vmatpush1.xpose.msra.mxu0 0.0
    %501 = vmatprep.subr.mxu0 0.0
    %502 = vmatpush1.xpose.msra.mxu0 0.0
    %503 = vmatprep.subr.mxu0 0.0
    %504 = vmatpush1.xpose.msra.mxu0 0.0
    %505 = vmatprep.subr.mxu0 0.0
    %506 = vmatpush1.xpose.msra.mxu0 0.0
    %507 = vmatprep.subr.mxu0 0.0
    %508 = vmatpush1.xpose.msra.mxu0 0.0
    %509 = vmatprep.subr.mxu0 0.0
    %510 = vmatpush1.xpose.msra.mxu0 0.0
    %511 = vmatprep.subr.mxu0 0.0
    %512 = vmatpush1.xpose.msra.mxu0 0.0
    %513 = vmatprep.subr.mxu0 0.0
    %514 = vmatpush1.xpose.msra.mxu0 0.0
    %515 = vmatprep.mubr.f32.mxu0 %v450
    %516 = vmatmul.mubr.f32.gmra.mrb[0].mxu0 %v443
    %v517 = vpop.f32.mrb[0].mxu0
    %v518 = vadd.f32 0.0, %v517
    %v519 = vpop.f32.mrb[0].mxu0
    %520 = vdwg.mxu0
    %v521 = vmul.f32 %v518, 0.0625
    %vm522 = vcmp.gt.f32.partialorder %v521, 0.0
    %v523 = vsel %vm522, %v521, 0.0
    %vm524 = vcmask 64512
    %v525 = vsel %vm524, %v523, 0.0
    %526 = vadd.xlane.f32.xlu0 %v525
    %v527 = vpop.xlane.xlu0 %526
    %v528 = vmax.f32 %v527, 1e-12
    %v529 = vrcp.pop %v528
    %v530 = vmul.f32 %v523, %v529
    %v531 = vld [vmem:[#allocation10] sm:$0xff]
    %v532 = vld [vmem:[#allocation10 + $0x8] sm:$0xff]
    %v533 = vmul.f32 %v126, %v126
    %v534 = vmul.f32 %v531, %v531
    %v535 = vmul.f32 %v532, %v532
    %v537 = vsel %vm132, %v533, 0
    %v540 = vsel %vm132, %v534, 0
    %v543 = vsel %vm132, %v535, 0
    %545 = vmatprep.subr.mxu0 0.0
    %546 = vmatpush1.xpose.msra.mxu0 %v540
    %547 = vmatprep.subr.mxu0 0.0
    %548 = vmatpush1.xpose.msra.mxu0 %v543
    %549 = vmatprep.subr.mxu0 0.0
    %550 = vmatpush1.xpose.msra.mxu0 0.0
    %551 = vmatprep.subr.mxu0 0.0
    %552 = vmatpush1.xpose.msra.mxu0 0.0
    %553 = vmatprep.subr.mxu0 0.0
    %554 = vmatpush1.xpose.msra.mxu0 0.0
    %555 = vmatprep.subr.mxu0 0.0
    %556 = vmatpush1.xpose.msra.mxu0 0.0
    %557 = vmatprep.subr.mxu0 0.0
    %558 = vmatpush1.xpose.msra.mxu0 0.0
    %559 = vmatprep.subr.mxu0 0.0
    %560 = vmatpush1.xpose.msra.mxu0 0.0
    %561 = vmatprep.subr.mxu0 0.0
    %562 = vmatpush1.xpose.msra.mxu0 0.0
    %563 = vmatprep.subr.mxu0 0.0
    %564 = vmatpush1.xpose.msra.mxu0 0.0
    %565 = vmatprep.subr.mxu0 0.0
    %566 = vmatpush1.xpose.msra.mxu0 0.0
    %567 = vmatprep.subr.mxu0 0.0
    %568 = vmatpush1.xpose.msra.mxu0 0.0
    %569 = vmatprep.subr.mxu0 0.0
    %570 = vmatpush1.xpose.msra.mxu0 0.0
    %571 = vmatprep.subr.mxu0 0.0
    %572 = vmatpush1.xpose.msra.mxu0 0.0
    %573 = vmatprep.subr.mxu0 0.0
    %574 = vmatpush1.xpose.msra.mxu0 0.0
    %575 = vmatprep.subr.mxu0 0.0
    %576 = vmatpush1.xpose.msra.mxu0 0.0
    %577 = vmatprep.subr.mxu0 0.0
    %578 = vmatpush1.xpose.msra.mxu0 0.0
    %579 = vmatprep.subr.mxu0 0.0
    %580 = vmatpush1.xpose.msra.mxu0 0.0
    %581 = vmatprep.subr.mxu0 0.0
    %582 = vmatpush1.xpose.msra.mxu0 0.0
    %583 = vmatprep.subr.mxu0 0.0
    %584 = vmatpush1.xpose.msra.mxu0 0.0
    %585 = vmatprep.subr.mxu0 0.0
    %586 = vmatpush1.xpose.msra.mxu0 0.0
    %587 = vmatprep.subr.mxu0 0.0
    %588 = vmatpush1.xpose.msra.mxu0 0.0
    %589 = vmatprep.subr.mxu0 0.0
    %590 = vmatpush1.xpose.msra.mxu0 0.0
    %591 = vmatprep.subr.mxu0 0.0
    %592 = vmatpush1.xpose.msra.mxu0 0.0
    %593 = vmatprep.subr.mxu0 0.0
    %594 = vmatpush1.xpose.msra.mxu0 0.0
    %595 = vmatprep.subr.mxu0 0.0
    %596 = vmatpush1.xpose.msra.mxu0 0.0
    %597 = vmatprep.subr.mxu0 0.0
    %598 = vmatpush1.xpose.msra.mxu0 0.0
    %599 = vmatprep.subr.mxu0 0.0
    %600 = vmatpush1.xpose.msra.mxu0 0.0
    %601 = vmatprep.subr.mxu0 0.0
    %602 = vmatpush1.xpose.msra.mxu0 0.0
    %603 = vmatprep.subr.mxu0 0.0
    %604 = vmatpush1.xpose.msra.mxu0 0.0
    %605 = vmatprep.subr.mxu0 0.0
    %606 = vmatpush1.xpose.msra.mxu0 0.0
    %607 = vmatprep.subr.mxu0 0.0
    %608 = vmatpush1.xpose.msra.mxu0 0.0
    %609 = vmatprep.mubr.f32.mxu0 0.0
    %610 = vmatmul.mubr.f32.gmra.mrb[0].mxu0 %v537
    %v611 = vpop.f32.mrb[0].mxu0
    %v612 = vadd.f32 0.0, %v611
    %v613 = vpop.f32.mrb[0].mxu0
    %614 = vdwg.mxu0
    %v615 = vmax.f32 %v612, 1e-24
    %v616 = vrsqrt.pop %v615
    %v617 = vlaneseq
    %v618 = vshrl.u32 %v617, 7
    %v619 = vsub.s32 0, %v618
    %v620 = vrot.slane %v531, %v619
    %v621 = vmul.f32 %v126, %v620
    %623 = vset.pattern.permute.xlu0 0
    %624 = vperm.xlu0 %623, %v616
    %v625 = vpop.permute.xlu0 %624
    %v627 = vmul.f32 %v621, %v625
    %v628 = vlaneseq
    %v629 = vshrl.u32 %v628, 7
    %v630 = vsub.s32 1, %v629
    %v631 = vrot.slane %v531, %v630
    %v632 = vmul.f32 %v126, %v631
    %633 = vset.pattern.permute.xlu0 1
    %634 = vperm.xlu0 %633, %v616
    %v635 = vpop.permute.xlu0 %634
    %v637 = vmul.f32 %v632, %v635
    %v638 = vlaneseq
    %v639 = vshrl.u32 %v638, 7
    %v640 = vsub.s32 2, %v639
    %v641 = vrot.slane %v531, %v640
    %v642 = vmul.f32 %v126, %v641
    %643 = vset.pattern.permute.xlu0 2
    %644 = vperm.xlu0 %643, %v616
    %v645 = vpop.permute.xlu0 %644
    %v647 = vmul.f32 %v642, %v645
    %v648 = vlaneseq
    %v649 = vshrl.u32 %v648, 7
    %v650 = vsub.s32 3, %v649
    %v651 = vrot.slane %v531, %v650
    %v652 = vmul.f32 %v126, %v651
    %653 = vset.pattern.permute.xlu0 3
    %654 = vperm.xlu0 %653, %v616
    %v655 = vpop.permute.xlu0 %654
    %v657 = vmul.f32 %v652, %v655
    %v658 = vlaneseq
    %v659 = vshrl.u32 %v658, 7
    %v660 = vsub.s32 4, %v659
    %v661 = vrot.slane %v531, %v660
    %v662 = vmul.f32 %v126, %v661
    %663 = vset.pattern.permute.xlu0 4
    %664 = vperm.xlu0 %663, %v616
    %v665 = vpop.permute.xlu0 %664
    %v667 = vmul.f32 %v662, %v665
    %v668 = vlaneseq
    %v669 = vshrl.u32 %v668, 7
    %v670 = vsub.s32 5, %v669
    %v671 = vrot.slane %v531, %v670
    %v672 = vmul.f32 %v126, %v671
    %673 = vset.pattern.permute.xlu0 5
    %674 = vperm.xlu0 %673, %v616
    %v675 = vpop.permute.xlu0 %674
    %v677 = vmul.f32 %v672, %v675
    %v678 = vlaneseq
    %v679 = vshrl.u32 %v678, 7
    %v680 = vsub.s32 6, %v679
    %v681 = vrot.slane %v531, %v680
    %v682 = vmul.f32 %v126, %v681
    %683 = vset.pattern.permute.xlu0 6
    %684 = vperm.xlu0 %683, %v616
    %v685 = vpop.permute.xlu0 %684
    %v687 = vmul.f32 %v682, %v685
    %v688 = vlaneseq
    %v689 = vshrl.u32 %v688, 7
    %v690 = vsub.s32 7, %v689
    %v691 = vrot.slane %v531, %v690
    %v692 = vmul.f32 %v126, %v691
    %693 = vset.pattern.permute.xlu0 7
    %694 = vperm.xlu0 %693, %v616
    %v695 = vpop.permute.xlu0 %694
    %v697 = vmul.f32 %v692, %v695
    %v698 = vlaneseq
    %v699 = vshrl.u32 %v698, 7
    %v700 = vsub.s32 0, %v699
    %v701 = vrot.slane %v532, %v700
    %v702 = vmul.f32 %v126, %v701
    %703 = vset.pattern.permute.xlu0 8
    %704 = vperm.xlu0 %703, %v616
    %v705 = vpop.permute.xlu0 %704
    %v707 = vmul.f32 %v702, %v705
    %v708 = vlaneseq
    %v709 = vshrl.u32 %v708, 7
    %v710 = vsub.s32 1, %v709
    %v711 = vrot.slane %v532, %v710
    %v712 = vmul.f32 %v126, %v711
    %713 = vset.pattern.permute.xlu0 9
    %714 = vperm.xlu0 %713, %v616
    %v715 = vpop.permute.xlu0 %714
    %v717 = vmul.f32 %v712, %v715
    %v718 = vlaneseq
    %v719 = vshrl.u32 %v718, 7
    %v720 = vsub.s32 2, %v719
    %v721 = vrot.slane %v532, %v720
    %v722 = vmul.f32 %v126, %v721
    %723 = vset.pattern.permute.xlu0 10
    %724 = vperm.xlu0 %723, %v616
    %v725 = vpop.permute.xlu0 %724
    %v727 = vmul.f32 %v722, %v725
    %v728 = vlaneseq
    %v729 = vshrl.u32 %v728, 7
    %v730 = vsub.s32 3, %v729
    %v731 = vrot.slane %v532, %v730
    %v732 = vmul.f32 %v126, %v731
    %733 = vset.pattern.permute.xlu0 11
    %734 = vperm.xlu0 %733, %v616
    %v735 = vpop.permute.xlu0 %734
    %v737 = vmul.f32 %v732, %v735
    %v738 = vlaneseq
    %v739 = vshrl.u32 %v738, 7
    %v740 = vsub.s32 4, %v739
    %v741 = vrot.slane %v532, %v740
    %v742 = vmul.f32 %v126, %v741
    %743 = vset.pattern.permute.xlu0 12
    %744 = vperm.xlu0 %743, %v616
    %v745 = vpop.permute.xlu0 %744
    %v747 = vmul.f32 %v742, %v745
    %v748 = vlaneseq
    %v749 = vshrl.u32 %v748, 7
    %v750 = vsub.s32 5, %v749
    %v751 = vrot.slane %v532, %v750
    %v752 = vmul.f32 %v126, %v751
    %753 = vset.pattern.permute.xlu0 13
    %754 = vperm.xlu0 %753, %v616
    %v755 = vpop.permute.xlu0 %754
    %v757 = vmul.f32 %v752, %v755
    %v758 = vlaneseq
    %v759 = vshrl.u32 %v758, 7
    %v760 = vsub.s32 6, %v759
    %v761 = vrot.slane %v532, %v760
    %v762 = vmul.f32 %v126, %v761
    %763 = vset.pattern.permute.xlu0 14
    %764 = vperm.xlu0 %763, %v616
    %v765 = vpop.permute.xlu0 %764
    %v767 = vmul.f32 %v762, %v765
    %v768 = vlaneseq
    %v769 = vshrl.u32 %v768, 7
    %v770 = vsub.s32 7, %v769
    %v771 = vrot.slane %v532, %v770
    %v772 = vmul.f32 %v126, %v771
    %773 = vset.pattern.permute.xlu0 15
    %774 = vperm.xlu0 %773, %v616
    %v775 = vpop.permute.xlu0 %774
    %v777 = vmul.f32 %v772, %v775
    %779 = vrot.lane.b32.xlu0 %v637, 16
    %v780 = vpop.permute.xlu0 %779
    %783 = vrot.lane.b32.xlu0 %v647, 32
    %v784 = vpop.permute.xlu0 %783
    %787 = vrot.lane.b32.xlu0 %v657, 48
    %v788 = vpop.permute.xlu0 %787
    %791 = vrot.lane.b32.xlu0 %v667, 64
    %v792 = vpop.permute.xlu0 %791
    %795 = vrot.lane.b32.xlu0 %v677, 80
    %v796 = vpop.permute.xlu0 %795
    %799 = vrot.lane.b32.xlu0 %v687, 96
    %v800 = vpop.permute.xlu0 %799
    %803 = vrot.lane.b32.xlu0 %v697, 112
    %v804 = vpop.permute.xlu0 %803
    %807 = vrot.lane.b32.xlu0 %v717, 16
    %v808 = vpop.permute.xlu0 %807
    %811 = vrot.lane.b32.xlu0 %v727, 32
    %v812 = vpop.permute.xlu0 %811
    %815 = vrot.lane.b32.xlu0 %v737, 48
    %v816 = vpop.permute.xlu0 %815
    %819 = vrot.lane.b32.xlu0 %v747, 64
    %v820 = vpop.permute.xlu0 %819
    %823 = vrot.lane.b32.xlu0 %v757, 80
    %v824 = vpop.permute.xlu0 %823
    %827 = vrot.lane.b32.xlu0 %v767, 96
    %v828 = vpop.permute.xlu0 %827
    %831 = vrot.lane.b32.xlu0 %v777, 112
    %v832 = vpop.permute.xlu0 %831
    %v834 = vsel %vm132, %v627, %v780
    %v835 = vsel %vm432, %v834, %v784
    %v836 = vsel %vm434, %v835, %v788
    %v837 = vsel %vm436, %v836, %v792
    %v838 = vsel %vm438, %v837, %v796
    %v839 = vsel %vm440, %v838, %v800
    %v840 = vsel %vm442, %v839, %v804
    %v841 = vsel %vm132, %v707, %v808
    %v842 = vsel %vm432, %v841, %v812
    %v843 = vsel %vm434, %v842, %v816
    %v844 = vsel %vm436, %v843, %v820
    %v845 = vsel %vm438, %v844, %v824
    %v846 = vsel %vm440, %v845, %v828
    %v847 = vsel %vm442, %v846, %v832
    %848 = vmatprep.subr.mxu0 %v847
    %849 = vmatpush1.xpose.msra.mxu0 %v840
    %850 = vmatprep.subr.mxu0 0.0
    %851 = vmatpush1.xpose.msra.mxu0 0.0
    %852 = vmatprep.subr.mxu0 0.0
    %853 = vmatpush1.xpose.msra.mxu0 0.0
    %854 = vmatprep.subr.mxu0 0.0
    %855 = vmatpush1.xpose.msra.mxu0 0.0
    %856 = vmatprep.subr.mxu0 0.0
    %857 = vmatpush1.xpose.msra.mxu0 0.0
    %858 = vmatprep.subr.mxu0 0.0
    %859 = vmatpush1.xpose.msra.mxu0 0.0
    %860 = vmatprep.subr.mxu0 0.0
    %861 = vmatpush1.xpose.msra.mxu0 0.0
    %862 = vmatprep.subr.mxu0 0.0
    %863 = vmatpush1.xpose.msra.mxu0 0.0
    %864 = vmatprep.subr.mxu0 0.0
    %865 = vmatpush1.xpose.msra.mxu0 0.0
    %866 = vmatprep.subr.mxu0 0.0
    %867 = vmatpush1.xpose.msra.mxu0 0.0
    %868 = vmatprep.subr.mxu0 0.0
    %869 = vmatpush1.xpose.msra.mxu0 0.0
    %870 = vmatprep.subr.mxu0 0.0
    %871 = vmatpush1.xpose.msra.mxu0 0.0
    %872 = vmatprep.subr.mxu0 0.0
    %873 = vmatpush1.xpose.msra.mxu0 0.0
    %874 = vmatprep.subr.mxu0 0.0
    %875 = vmatpush1.xpose.msra.mxu0 0.0
    %876 = vmatprep.subr.mxu0 0.0
    %877 = vmatpush1.xpose.msra.mxu0 0.0
    %878 = vmatprep.subr.mxu0 0.0
    %879 = vmatpush1.xpose.msra.mxu0 0.0
    %880 = vmatprep.subr.mxu0 0.0
    %881 = vmatpush1.xpose.msra.mxu0 0.0
    %882 = vmatprep.subr.mxu0 0.0
    %883 = vmatpush1.xpose.msra.mxu0 0.0
    %884 = vmatprep.subr.mxu0 0.0
    %885 = vmatpush1.xpose.msra.mxu0 0.0
    %886 = vmatprep.subr.mxu0 0.0
    %887 = vmatpush1.xpose.msra.mxu0 0.0
    %888 = vmatprep.subr.mxu0 0.0
    %889 = vmatpush1.xpose.msra.mxu0 0.0
    %890 = vmatprep.subr.mxu0 0.0
    %891 = vmatpush1.xpose.msra.mxu0 0.0
    %892 = vmatprep.subr.mxu0 0.0
    %893 = vmatpush1.xpose.msra.mxu0 0.0
    %894 = vmatprep.subr.mxu0 0.0
    %895 = vmatpush1.xpose.msra.mxu0 0.0
    %896 = vmatprep.subr.mxu0 0.0
    %897 = vmatpush1.xpose.msra.mxu0 0.0
    %898 = vmatprep.subr.mxu0 0.0
    %899 = vmatpush1.xpose.msra.mxu0 0.0
    %900 = vmatprep.subr.mxu0 0.0
    %901 = vmatpush1.xpose.msra.mxu0 0.0
    %902 = vmatprep.subr.mxu0 0.0
    %903 = vmatpush1.xpose.msra.mxu0 0.0
    %904 = vmatprep.subr.mxu0 0.0
    %905 = vmatpush1.xpose.msra.mxu0 0.0
    %906 = vmatprep.subr.mxu0 0.0
    %907 = vmatpush1.xpose.msra.mxu0 0.0
    %908 = vmatprep.subr.mxu0 0.0
    %909 = vmatpush1.xpose.msra.mxu0 0.0
    %910 = vmatprep.subr.mxu0 0.0
    %911 = vmatpush1.xpose.msra.mxu0 0.0
    %912 = vmatprep.mubr.f32.mxu0 %v847
    %913 = vmatmul.mubr.f32.gmra.mrb[0].mxu0 %v840
    %v914 = vpop.f32.mrb[0].mxu0
    %v915 = vadd.f32 0.0, %v914
    %v916 = vpop.f32.mrb[0].mxu0
    %917 = vdwg.mxu0
    %v918 = vmul.f32 %v915, 0.0625
    %vm919 = vcmp.gt.f32.partialorder %v918, 0.0
    %v920 = vsel %vm919, %v918, 0.0
    %v921 = vsel %vm524, %v920, 0.0
    %922 = vadd.xlane.f32.xlu0 %v921
    %v923 = vpop.xlane.xlu0 %922
    %v924 = vmax.f32 %v923, 1e-12
    %v925 = vrcp.pop %v924
    %v926 = vmul.f32 %v920, %v925
    %s927 = sld [smem:[#allocation2]]
    %s928 = sld [smem:[#allocation2 + $0x80]]
    %v929 = vstv %s927
    %v930 = vmul.f32 %v929, %v530
    %v931 = vstv %s928
    %v932 = vmul.f32 %v931, %v926
    %v933 = vadd.f32 %v930, %v932
    %935 = vrot.lane.b32.xlu0 %v126, 16
    %v936 = vpop.permute.xlu0 %935
    %v938 = vsel %vm132, %v125, %v936
    %v939 = vld [vmem:[%s5] sm:$0xff]
    %v940 = vld [vmem:[%s5 + $0x8] sm:$0xff]
    %v941 = vld [vmem:[%s5 + $0x10] sm:$0xff]
    %v942 = vld [vmem:[%s5 + $0x18] sm:$0xff]
    %v944 = vsel %vm432, %v938, 0
    %946 = vmatprep.subr.mxu0 0.0
    %947 = vmatpush1.msra.mxu0 %v939
    %948 = vmatprep.subr.mxu0 0.0
    %949 = vmatpush1.msra.mxu0 %v940
    %950 = vmatprep.subr.mxu0 0.0
    %951 = vmatpush1.msra.mxu0 %v941
    %952 = vmatprep.subr.mxu0 0.0
    %953 = vmatpush1.msra.mxu0 %v942
    %954 = vmatprep.subr.mxu0 0.0
    %955 = vmatpush1.msra.mxu0 0.0
    %956 = vmatprep.subr.mxu0 0.0
    %957 = vmatpush1.msra.mxu0 0.0
    %958 = vmatprep.subr.mxu0 0.0
    %959 = vmatpush1.msra.mxu0 0.0
    %960 = vmatprep.subr.mxu0 0.0
    %961 = vmatpush1.msra.mxu0 0.0
    %962 = vmatprep.subr.mxu0 0.0
    %963 = vmatpush1.msra.mxu0 0.0
    %964 = vmatprep.subr.mxu0 0.0
    %965 = vmatpush1.msra.mxu0 0.0
    %966 = vmatprep.subr.mxu0 0.0
    %967 = vmatpush1.msra.mxu0 0.0
    %968 = vmatprep.subr.mxu0 0.0
    %969 = vmatpush1.msra.mxu0 0.0
    %970 = vmatprep.subr.mxu0 0.0
    %971 = vmatpush1.msra.mxu0 0.0
    %972 = vmatprep.subr.mxu0 0.0
    %973 = vmatpush1.msra.mxu0 0.0
    %974 = vmatprep.subr.mxu0 0.0
    %975 = vmatpush1.msra.mxu0 0.0
    %976 = vmatprep.subr.mxu0 0.0
    %977 = vmatpush1.msra.mxu0 0.0
    %978 = vmatprep.subr.mxu0 0.0
    %979 = vmatpush1.msra.mxu0 0.0
    %980 = vmatprep.subr.mxu0 0.0
    %981 = vmatpush1.msra.mxu0 0.0
    %982 = vmatprep.subr.mxu0 0.0
    %983 = vmatpush1.msra.mxu0 0.0
    %984 = vmatprep.subr.mxu0 0.0
    %985 = vmatpush1.msra.mxu0 0.0
    %986 = vmatprep.subr.mxu0 0.0
    %987 = vmatpush1.msra.mxu0 0.0
    %988 = vmatprep.subr.mxu0 0.0
    %989 = vmatpush1.msra.mxu0 0.0
    %990 = vmatprep.subr.mxu0 0.0
    %991 = vmatpush1.msra.mxu0 0.0
    %992 = vmatprep.subr.mxu0 0.0
    %993 = vmatpush1.msra.mxu0 0.0
    %994 = vmatprep.subr.mxu0 0.0
    %995 = vmatpush1.msra.mxu0 0.0
    %996 = vmatprep.subr.mxu0 0.0
    %997 = vmatpush1.msra.mxu0 0.0
    %998 = vmatprep.subr.mxu0 0.0
    %999 = vmatpush1.msra.mxu0 0.0
    %1000 = vmatprep.subr.mxu0 0.0
    %1001 = vmatpush1.msra.mxu0 0.0
    %1002 = vmatprep.subr.mxu0 0.0
    %1003 = vmatpush1.msra.mxu0 0.0
    %1004 = vmatprep.subr.mxu0 0.0
    %1005 = vmatpush1.msra.mxu0 0.0
    %1006 = vmatprep.subr.mxu0 0.0
    %1007 = vmatpush1.msra.mxu0 0.0
    %1008 = vmatprep.subr.mxu0 0.0
    %1009 = vmatpush1.msra.mxu0 0.0
    %1010 = vmatprep.mubr.f32.mxu0 0.0
    %1011 = vmatmul.mubr.f32.gmra.mrb[0].mxu0 %v944
    %v1012 = vpop.f32.mrb[0].mxu0
    %v1013 = vadd.f32 0.0, %v1012
    %v1014 = vpop.f32.mrb[0].mxu0
    %1015 = vdwg.mxu0
    %v1016 = vld [vmem:[%s6] sm:$0x1]
    %v1018 = vlaneseq
    %v1019 = vshrl.u32 %v1018, 7
    %v1020 = vsub.s32 0, %v1019
    %v1021 = vrot.slane %v1016, %v1020
    %v1024 = vsel %vm524, %v933, 0
    %1026 = vmatprep.subr.mxu0 0.0
    %1027 = vmatpush1.msra.mxu0 %v1013
    %1028 = vmatprep.subr.mxu0 0.0
    %1029 = vmatpush1.msra.mxu0 0.0
    %1030 = vmatprep.subr.mxu0 0.0
    %1031 = vmatpush1.msra.mxu0 0.0
    %1032 = vmatprep.subr.mxu0 0.0
    %1033 = vmatpush1.msra.mxu0 0.0
    %1034 = vmatprep.subr.mxu0 0.0
    %1035 = vmatpush1.msra.mxu0 0.0
    %1036 = vmatprep.subr.mxu0 0.0
    %1037 = vmatpush1.msra.mxu0 0.0
    %1038 = vmatprep.subr.mxu0 0.0
    %1039 = vmatpush1.msra.mxu0 0.0
    %1040 = vmatprep.subr.mxu0 0.0
    %1041 = vmatpush1.msra.mxu0 0.0
    %1042 = vmatprep.subr.mxu0 0.0
    %1043 = vmatpush1.msra.mxu0 0.0
    %1044 = vmatprep.subr.mxu0 0.0
    %1045 = vmatpush1.msra.mxu0 0.0
    %1046 = vmatprep.subr.mxu0 0.0
    %1047 = vmatpush1.msra.mxu0 0.0
    %1048 = vmatprep.subr.mxu0 0.0
    %1049 = vmatpush1.msra.mxu0 0.0
    %1050 = vmatprep.subr.mxu0 0.0
    %1051 = vmatpush1.msra.mxu0 0.0
    %1052 = vmatprep.subr.mxu0 0.0
    %1053 = vmatpush1.msra.mxu0 0.0
    %1054 = vmatprep.subr.mxu0 0.0
    %1055 = vmatpush1.msra.mxu0 0.0
    %1056 = vmatprep.subr.mxu0 0.0
    %1057 = vmatpush1.msra.mxu0 0.0
    %1058 = vmatprep.subr.mxu0 0.0
    %1059 = vmatpush1.msra.mxu0 0.0
    %1060 = vmatprep.subr.mxu0 0.0
    %1061 = vmatpush1.msra.mxu0 0.0
    %1062 = vmatprep.subr.mxu0 0.0
    %1063 = vmatpush1.msra.mxu0 0.0
    %1064 = vmatprep.subr.mxu0 0.0
    %1065 = vmatpush1.msra.mxu0 0.0
    %1066 = vmatprep.subr.mxu0 0.0
    %1067 = vmatpush1.msra.mxu0 0.0
    %1068 = vmatprep.subr.mxu0 0.0
    %1069 = vmatpush1.msra.mxu0 0.0
    %1070 = vmatprep.subr.mxu0 0.0
    %1071 = vmatpush1.msra.mxu0 0.0
    %1072 = vmatprep.subr.mxu0 0.0
    %1073 = vmatpush1.msra.mxu0 0.0
    %1074 = vmatprep.subr.mxu0 0.0
    %1075 = vmatpush1.msra.mxu0 0.0
    %1076 = vmatprep.subr.mxu0 0.0
    %1077 = vmatpush1.msra.mxu0 0.0
    %1078 = vmatprep.subr.mxu0 0.0
    %1079 = vmatpush1.msra.mxu0 0.0
    %1080 = vmatprep.subr.mxu0 0.0
    %1081 = vmatpush1.msra.mxu0 0.0
    %1082 = vmatprep.subr.mxu0 0.0
    %1083 = vmatpush1.msra.mxu0 0.0
    %1084 = vmatprep.subr.mxu0 0.0
    %1085 = vmatpush1.msra.mxu0 0.0
    %1086 = vmatprep.subr.mxu0 0.0
    %1087 = vmatpush1.msra.mxu0 0.0
    %1088 = vmatprep.subr.mxu0 0.0
    %1089 = vmatpush1.msra.mxu0 0.0
    %1090 = vmatprep.mubr.f32.mxu0 0.0
    %1091 = vmatmul.mubr.f32.gmra.mrb[0].mxu0 %v1024
    %v1092 = vpop.f32.mrb[0].mxu0
    %v1093 = vadd.f32 %v1021, %v1092
    %v1094 = vpop.f32.mrb[0].mxu0
    %1095 = vdwg.mxu0
    %v1096 = vmax.f32 %v1093, 0.0
    %v1097 = vld [vmem:[%s7] sm:$0xff]
    %v1098 = vld [vmem:[%s7 + $0x8] sm:$0xff]
    %v1099 = vld [vmem:[%s7 + $0x10] sm:$0xff]
    %v1100 = vld [vmem:[%s7 + $0x18] sm:$0xff]
    %v1102 = vsel %vm432, %v1096, 0
    %1104 = vmatprep.subr.mxu0 0.0
    %1105 = vmatpush1.msra.mxu0 %v1097
    %1106 = vmatprep.subr.mxu0 0.0
    %1107 = vmatpush1.msra.mxu0 %v1098
    %1108 = vmatprep.subr.mxu0 0.0
    %1109 = vmatpush1.msra.mxu0 %v1099
    %1110 = vmatprep.subr.mxu0 0.0
    %1111 = vmatpush1.msra.mxu0 %v1100
    %1112 = vmatprep.subr.mxu0 0.0
    %1113 = vmatpush1.msra.mxu0 0.0
    %1114 = vmatprep.subr.mxu0 0.0
    %1115 = vmatpush1.msra.mxu0 0.0
    %1116 = vmatprep.subr.mxu0 0.0
    %1117 = vmatpush1.msra.mxu0 0.0
    %1118 = vmatprep.subr.mxu0 0.0
    %1119 = vmatpush1.msra.mxu0 0.0
    %1120 = vmatprep.subr.mxu0 0.0
    %1121 = vmatpush1.msra.mxu0 0.0
    %1122 = vmatprep.subr.mxu0 0.0
    %1123 = vmatpush1.msra.mxu0 0.0
    %1124 = vmatprep.subr.mxu0 0.0
    %1125 = vmatpush1.msra.mxu0 0.0
    %1126 = vmatprep.subr.mxu0 0.0
    %1127 = vmatpush1.msra.mxu0 0.0
    %1128 = vmatprep.subr.mxu0 0.0
    %1129 = vmatpush1.msra.mxu0 0.0
    %1130 = vmatprep.subr.mxu0 0.0
    %1131 = vmatpush1.msra.mxu0 0.0
    %1132 = vmatprep.subr.mxu0 0.0
    %1133 = vmatpush1.msra.mxu0 0.0
    %1134 = vmatprep.subr.mxu0 0.0
    %1135 = vmatpush1.msra.mxu0 0.0
    %1136 = vmatprep.subr.mxu0 0.0
    %1137 = vmatpush1.msra.mxu0 0.0
    %1138 = vmatprep.subr.mxu0 0.0
    %1139 = vmatpush1.msra.mxu0 0.0
    %1140 = vmatprep.subr.mxu0 0.0
    %1141 = vmatpush1.msra.mxu0 0.0
    %1142 = vmatprep.subr.mxu0 0.0
    %1143 = vmatpush1.msra.mxu0 0.0
    %1144 = vmatprep.subr.mxu0 0.0
    %1145 = vmatpush1.msra.mxu0 0.0
    %1146 = vmatprep.subr.mxu0 0.0
    %1147 = vmatpush1.msra.mxu0 0.0
    %1148 = vmatprep.subr.mxu0 0.0
    %1149 = vmatpush1.msra.mxu0 0.0
    %1150 = vmatprep.subr.mxu0 0.0
    %1151 = vmatpush1.msra.mxu0 0.0
    %1152 = vmatprep.subr.mxu0 0.0
    %1153 = vmatpush1.msra.mxu0 0.0
    %1154 = vmatprep.subr.mxu0 0.0
    %1155 = vmatpush1.msra.mxu0 0.0
    %1156 = vmatprep.subr.mxu0 0.0
    %1157 = vmatpush1.msra.mxu0 0.0
    %1158 = vmatprep.subr.mxu0 0.0
    %1159 = vmatpush1.msra.mxu0 0.0
    %1160 = vmatprep.subr.mxu0 0.0
    %1161 = vmatpush1.msra.mxu0 0.0
    %1162 = vmatprep.subr.mxu0 0.0
    %1163 = vmatpush1.msra.mxu0 0.0
    %1164 = vmatprep.subr.mxu0 0.0
    %1165 = vmatpush1.msra.mxu0 0.0
    %1166 = vmatprep.subr.mxu0 0.0
    %1167 = vmatpush1.msra.mxu0 0.0
    %1168 = vmatprep.mubr.f32.mxu0 0.0
    %1169 = vmatmul.mubr.f32.gmra.mrb[0].mxu0 %v1102
    %v1170 = vpop.f32.mrb[0].mxu0
    %v1171 = vadd.f32 0.0, %v1170
    %v1172 = vpop.f32.mrb[0].mxu0
    %1173 = vdwg.mxu0
    %v1174 = vld [vmem:[%s8] sm:$0x1]
    %v1176 = vlaneseq
    %v1177 = vshrl.u32 %v1176, 7
    %v1178 = vsub.s32 0, %v1177
    %v1179 = vrot.slane %v1174, %v1178
    %1181 = vmatprep.subr.mxu0 0.0
    %1182 = vmatpush1.msra.mxu0 %v1171
    %1183 = vmatprep.subr.mxu0 0.0
    %1184 = vmatpush1.msra.mxu0 0.0
    %1185 = vmatprep.subr.mxu0 0.0
    %1186 = vmatpush1.msra.mxu0 0.0
    %1187 = vmatprep.subr.mxu0 0.0
    %1188 = vmatpush1.msra.mxu0 0.0
    %1189 = vmatprep.subr.mxu0 0.0
    %1190 = vmatpush1.msra.mxu0 0.0
    %1191 = vmatprep.subr.mxu0 0.0
    %1192 = vmatpush1.msra.mxu0 0.0
    %1193 = vmatprep.subr.mxu0 0.0
    %1194 = vmatpush1.msra.mxu0 0.0
    %1195 = vmatprep.subr.mxu0 0.0
    %1196 = vmatpush1.msra.mxu0 0.0
    %1197 = vmatprep.subr.mxu0 0.0
    %1198 = vmatpush1.msra.mxu0 0.0
    %1199 = vmatprep.subr.mxu0 0.0
    %1200 = vmatpush1.msra.mxu0 0.0
    %1201 = vmatprep.subr.mxu0 0.0
    %1202 = vmatpush1.msra.mxu0 0.0
    %1203 = vmatprep.subr.mxu0 0.0
    %1204 = vmatpush1.msra.mxu0 0.0
    %1205 = vmatprep.subr.mxu0 0.0
    %1206 = vmatpush1.msra.mxu0 0.0
    %1207 = vmatprep.subr.mxu0 0.0
    %1208 = vmatpush1.msra.mxu0 0.0
    %1209 = vmatprep.subr.mxu0 0.0
    %1210 = vmatpush1.msra.mxu0 0.0
    %1211 = vmatprep.subr.mxu0 0.0
    %1212 = vmatpush1.msra.mxu0 0.0
    %1213 = vmatprep.subr.mxu0 0.0
    %1214 = vmatpush1.msra.mxu0 0.0
    %1215 = vmatprep.subr.mxu0 0.0
    %1216 = vmatpush1.msra.mxu0 0.0
    %1217 = vmatprep.subr.mxu0 0.0
    %1218 = vmatpush1.msra.mxu0 0.0
    %1219 = vmatprep.subr.mxu0 0.0
    %1220 = vmatpush1.msra.mxu0 0.0
    %1221 = vmatprep.subr.mxu0 0.0
    %1222 = vmatpush1.msra.mxu0 0.0
    %1223 = vmatprep.subr.mxu0 0.0
    %1224 = vmatpush1.msra.mxu0 0.0
    %1225 = vmatprep.subr.mxu0 0.0
    %1226 = vmatpush1.msra.mxu0 0.0
    %1227 = vmatprep.subr.mxu0 0.0
    %1228 = vmatpush1.msra.mxu0 0.0
    %1229 = vmatprep.subr.mxu0 0.0
    %1230 = vmatpush1.msra.mxu0 0.0
    %1231 = vmatprep.subr.mxu0 0.0
    %1232 = vmatpush1.msra.mxu0 0.0
    %1233 = vmatprep.subr.mxu0 0.0
    %1234 = vmatpush1.msra.mxu0 0.0
    %1235 = vmatprep.subr.mxu0 0.0
    %1236 = vmatpush1.msra.mxu0 0.0
    %1237 = vmatprep.subr.mxu0 0.0
    %1238 = vmatpush1.msra.mxu0 0.0
    %1239 = vmatprep.subr.mxu0 0.0
    %1240 = vmatpush1.msra.mxu0 0.0
    %1241 = vmatprep.subr.mxu0 0.0
    %1242 = vmatpush1.msra.mxu0 0.0
    %1243 = vmatprep.subr.mxu0 0.0
    %1244 = vmatpush1.msra.mxu0 0.0
    %1245 = vmatprep.mubr.f32.mxu0 0.0
    %1246 = vmatmul.mubr.f32.gmra.mrb[0].mxu0 %v1024
    %v1247 = vpop.f32.mrb[0].mxu0
    %v1248 = vadd.f32 %v1179, %v1247
    %v1249 = vpop.f32.mrb[0].mxu0
    %1250 = vdwg.mxu0
    %v1251 = vadd.f32 %v1096, %v1248
    %v1252 = vmul.f32 %v1251, 0.5
    %v1253 = vld [vmem:[#allocation12] sm:$0xff]
    %v1254 = vld [vmem:[#allocation12 + $0x8] sm:$0xff]
    %v1255 = vld [vmem:[#allocation12 + $0x10] sm:$0xff]
    %v1256 = vld [vmem:[#allocation12 + $0x18] sm:$0xff]
    %v1257 = vld [vmem:[%s10] sm:$0x1]
    %v1259 = vlaneseq
    %v1260 = vshrl.u32 %v1259, 7
    %v1261 = vsub.s32 0, %v1260
    %v1262 = vrot.slane %v1257, %v1261
    %v1265 = vsel %vm432, %v1252, 0
    %1267 = vmatprep.subr.mxu0 0.0
    %1268 = vmatpush1.msra.mxu0 %v1253
    %1269 = vmatprep.subr.mxu0 0.0
    %1270 = vmatpush1.msra.mxu0 %v1254
    %1271 = vmatprep.subr.mxu0 0.0
    %1272 = vmatpush1.msra.mxu0 %v1255
    %1273 = vmatprep.subr.mxu0 0.0
    %1274 = vmatpush1.msra.mxu0 %v1256
    %1275 = vmatprep.subr.mxu0 0.0
    %1276 = vmatpush1.msra.mxu0 0.0
    %1277 = vmatprep.subr.mxu0 0.0
    %1278 = vmatpush1.msra.mxu0 0.0
    %1279 = vmatprep.subr.mxu0 0.0
    %1280 = vmatpush1.msra.mxu0 0.0
    %1281 = vmatprep.subr.mxu0 0.0
    %1282 = vmatpush1.msra.mxu0 0.0
    %1283 = vmatprep.subr.mxu0 0.0
    %1284 = vmatpush1.msra.mxu0 0.0
    %1285 = vmatprep.subr.mxu0 0.0
    %1286 = vmatpush1.msra.mxu0 0.0
    %1287 = vmatprep.subr.mxu0 0.0
    %1288 = vmatpush1.msra.mxu0 0.0
    %1289 = vmatprep.subr.mxu0 0.0
    %1290 = vmatpush1.msra.mxu0 0.0
    %1291 = vmatprep.subr.mxu0 0.0
    %1292 = vmatpush1.msra.mxu0 0.0
    %1293 = vmatprep.subr.mxu0 0.0
    %1294 = vmatpush1.msra.mxu0 0.0
    %1295 = vmatprep.subr.mxu0 0.0
    %1296 = vmatpush1.msra.mxu0 0.0
    %1297 = vmatprep.subr.mxu0 0.0
    %1298 = vmatpush1.msra.mxu0 0.0
    %1299 = vmatprep.subr.mxu0 0.0
    %1300 = vmatpush1.msra.mxu0 0.0
    %1301 = vmatprep.subr.mxu0 0.0
    %1302 = vmatpush1.msra.mxu0 0.0
    %1303 = vmatprep.subr.mxu0 0.0
    %1304 = vmatpush1.msra.mxu0 0.0
    %1305 = vmatprep.subr.mxu0 0.0
    %1306 = vmatpush1.msra.mxu0 0.0
    %1307 = vmatprep.subr.mxu0 0.0
    %1308 = vmatpush1.msra.mxu0 0.0
    %1309 = vmatprep.subr.mxu0 0.0
    %1310 = vmatpush1.msra.mxu0 0.0
    %1311 = vmatprep.subr.mxu0 0.0
    %1312 = vmatpush1.msra.mxu0 0.0
    %1313 = vmatprep.subr.mxu0 0.0
    %1314 = vmatpush1.msra.mxu0 0.0
    %1315 = vmatprep.subr.mxu0 0.0
    %1316 = vmatpush1.msra.mxu0 0.0
    %1317 = vmatprep.subr.mxu0 0.0
    %1318 = vmatpush1.msra.mxu0 0.0
    %1319 = vmatprep.subr.mxu0 0.0
    %1320 = vmatpush1.msra.mxu0 0.0
    %1321 = vmatprep.subr.mxu0 0.0
    %1322 = vmatpush1.msra.mxu0 0.0
    %1323 = vmatprep.subr.mxu0 0.0
    %1324 = vmatpush1.msra.mxu0 0.0
    %1325 = vmatprep.subr.mxu0 0.0
    %1326 = vmatpush1.msra.mxu0 0.0
    %1327 = vmatprep.subr.mxu0 0.0
    %1328 = vmatpush1.msra.mxu0 0.0
    %1329 = vmatprep.subr.mxu0 0.0
    %1330 = vmatpush1.msra.mxu0 0.0
    %1331 = vmatprep.mubr.f32.mxu0 0.0
    %1332 = vmatmul.mubr.f32.gmra.mrb[0].mxu0 %v1265
    %v1333 = vpop.f32.mrb[0].mxu0
    %v1334 = vadd.f32 %v1262, %v1333
    %v1335 = vpop.f32.mrb[0].mxu0
    %1336 = vdwg.mxu0
    %v1337 = vmax.f32 %v1334, 0.0
    %v1338 = vld [vmem:[%s11] sm:$0xff]
    %v1339 = vld [vmem:[%s11 + $0x8] sm:$0xff]
    %v1340 = vld [vmem:[%s11 + $0x10] sm:$0xff]
    %v1341 = vld [vmem:[%s11 + $0x18] sm:$0xff]
    %v1342 = vld [vmem:[%s12] sm:$0x1]
    %v1344 = vlaneseq
    %v1345 = vshrl.u32 %v1344, 7
    %v1346 = vsub.s32 0, %v1345
    %v1347 = vrot.slane %v1342, %v1346
    %v1350 = vsel %vm432, %v1337, 0
    %1352 = vmatprep.subr.mxu0 0.0
    %1353 = vmatpush1.msra.mxu0 %v1338
    %1354 = vmatprep.subr.mxu0 0.0
    %1355 = vmatpush1.msra.mxu0 %v1339
    %1356 = vmatprep.subr.mxu0 0.0
    %1357 = vmatpush1.msra.mxu0 %v1340
    %1358 = vmatprep.subr.mxu0 0.0
    %1359 = vmatpush1.msra.mxu0 %v1341
    %1360 = vmatprep.subr.mxu0 0.0
    %1361 = vmatpush1.msra.mxu0 0.0
    %1362 = vmatprep.subr.mxu0 0.0
    %1363 = vmatpush1.msra.mxu0 0.0
    %1364 = vmatprep.subr.mxu0 0.0
    %1365 = vmatpush1.msra.mxu0 0.0
    %1366 = vmatprep.subr.mxu0 0.0
    %1367 = vmatpush1.msra.mxu0 0.0
    %1368 = vmatprep.subr.mxu0 0.0
    %1369 = vmatpush1.msra.mxu0 0.0
    %1370 = vmatprep.subr.mxu0 0.0
    %1371 = vmatpush1.msra.mxu0 0.0
    %1372 = vmatprep.subr.mxu0 0.0
    %1373 = vmatpush1.msra.mxu0 0.0
    %1374 = vmatprep.subr.mxu0 0.0
    %1375 = vmatpush1.msra.mxu0 0.0
    %1376 = vmatprep.subr.mxu0 0.0
    %1377 = vmatpush1.msra.mxu0 0.0
    %1378 = vmatprep.subr.mxu0 0.0
    %1379 = vmatpush1.msra.mxu0 0.0
    %1380 = vmatprep.subr.mxu0 0.0
    %1381 = vmatpush1.msra.mxu0 0.0
    %1382 = vmatprep.subr.mxu0 0.0
    %1383 = vmatpush1.msra.mxu0 0.0
    %1384 = vmatprep.subr.mxu0 0.0
    %1385 = vmatpush1.msra.mxu0 0.0
    %1386 = vmatprep.subr.mxu0 0.0
    %1387 = vmatpush1.msra.mxu0 0.0
    %1388 = vmatprep.subr.mxu0 0.0
    %1389 = vmatpush1.msra.mxu0 0.0
    %1390 = vmatprep.subr.mxu0 0.0
    %1391 = vmatpush1.msra.mxu0 0.0
    %1392 = vmatprep.subr.mxu0 0.0
    %1393 = vmatpush1.msra.mxu0 0.0
    %1394 = vmatprep.subr.mxu0 0.0
    %1395 = vmatpush1.msra.mxu0 0.0
    %1396 = vmatprep.subr.mxu0 0.0
    %1397 = vmatpush1.msra.mxu0 0.0
    %1398 = vmatprep.subr.mxu0 0.0
    %1399 = vmatpush1.msra.mxu0 0.0
    %1400 = vmatprep.subr.mxu0 0.0
    %1401 = vmatpush1.msra.mxu0 0.0
    %1402 = vmatprep.subr.mxu0 0.0
    %1403 = vmatpush1.msra.mxu0 0.0
    %1404 = vmatprep.subr.mxu0 0.0
    %1405 = vmatpush1.msra.mxu0 0.0
    %1406 = vmatprep.subr.mxu0 0.0
    %1407 = vmatpush1.msra.mxu0 0.0
    %1408 = vmatprep.subr.mxu0 0.0
    %1409 = vmatpush1.msra.mxu0 0.0
    %1410 = vmatprep.subr.mxu0 0.0
    %1411 = vmatpush1.msra.mxu0 0.0
    %1412 = vmatprep.subr.mxu0 0.0
    %1413 = vmatpush1.msra.mxu0 0.0
    %1414 = vmatprep.subr.mxu0 0.0
    %1415 = vmatpush1.msra.mxu0 0.0
    %1416 = vmatprep.mubr.f32.mxu0 0.0
    %1417 = vmatmul.mubr.f32.gmra.mrb[0].mxu0 %v1350
    %v1418 = vpop.f32.mrb[0].mxu0
    %v1419 = vadd.f32 %v1347, %v1418
    %v1420 = vpop.f32.mrb[0].mxu0
    %1421 = vdwg.mxu0
    %1422 = vst.msk [vmem:[#allocation13] sm:$0xff] %vm524, %v1419
    %1424 = vrot.lane.b32.xlu0 %v1419, 120
    %v1425 = vpop.permute.xlu0 %1424
    %1427 = vst.msk [vmem:[#allocation14] sm:$0xff] %vm524, %v1425
    // Predicated region
    $region78: #{tpu_custom_call.1} parent=1 // pred_check
      _
    $region79: #{tpu_custom_call.1} parent=1 // pred_check_branch
      %1429 = sbr.rel (0) target = $region81
    $region80: #{tpu_custom_call.1} parent=1 // pred_region
      %s1431 = ssub.s32 128, 128
      %1432 = vsyncadd [#allocation4], %s1431
      %s1434 = sshll.u32 [#allocation13], 4
      %s1435 = int_to_ptr.vmem [resolvable:$true] %s1434
      %1437 = dma.vmem_to_hbm [thread:$0]  %s1435, 128, %s13, [#allocation4]
    $region81: #{tpu_custom_call.1} parent=1 // pred_fallthru
      _
    // Predicated region
    $region82: #{tpu_custom_call.1} parent=1 // pred_check
      _
    $region83: #{tpu_custom_call.1} parent=1 // pred_check_branch
      %1439 = sbr.rel (0) target = $region85
    $region84: #{tpu_custom_call.1} parent=1 // pred_region
      %s1441 = ssub.s32 128, 128
      %1442 = vsyncadd [#allocation15], %s1441
      %s1444 = sshll.u32 [#allocation14], 4
      %s1445 = int_to_ptr.vmem [resolvable:$true] %s1444
      %1447 = dma.vmem_to_hbm [thread:$0]  %s1445, 128, %s14, [#allocation15]
    $region85: #{tpu_custom_call.1} parent=1 // pred_fallthru
      _
    // Predicated region
    $region86: #{tpu_custom_call.1} parent=1 // pred_check
      _
    $region87: #{tpu_custom_call.1} parent=1 // pred_check_branch
      %1449 = sbr.rel (0) target = $region89
    $region88: #{tpu_custom_call.1} parent=1 // pred_region
      %1450 = dma.done [#allocation4], 128
    $region89: #{tpu_custom_call.1} parent=1 // pred_fallthru
      _
    // Predicated region
    $region90: #{tpu_custom_call.1} parent=1 // pred_check
      _
    $region91: #{tpu_custom_call.1} parent=1 // pred_check_branch
      %1452 = sbr.rel (0) target = $region93
    $region92: #{tpu_custom_call.1} parent=1 // pred_region
      %1453 = dma.done [#allocation15], 128
    $region93: #{tpu_custom_call.1} parent=1 // pred_fallthru
      _
    %1454 = vsyncpa [#allocation3], 1
    %1455 = vsyncpa [#allocation8], 1
    %1456 = vsyncpa [#allocation11], 1
    %1457 = vsyncpa [#allocation4], 1
    %1458 = vsyncpa [#allocation15], 1
    %1459 = vsyncpa [#allocation5], 1

</llo_original>
